<compile_context>
chip_gen: v7x
topology: tpu7x:2x2x1
jax: 0.10.0
libtpu: 0.0.40
codegen_flags: <defaults>
</compile_context>

<pallas_src>
import jax
import jax.numpy as jnp
from jax.experimental import pallas as pl
from jax.experimental.pallas import tpu as pltpu

LEAKY_SLOPE = 0.01  # F.leaky_relu default negative_slope


def _round_up(x, m):
    return (x + m - 1) // m * m


def _leaky_relu(x):
    # max(x, slope*x): 2 VALU ops instead of cmp + mul + select.
    return jnp.maximum(x, LEAKY_SLOPE * x)


def actor_kernel(state_ref, w1_ref, w2_ref, w3_ref, w4_ref, bias_ref, out_ref):
    h1 = w1_ref.shape[1]
    h2 = w2_ref.shape[1]
    h3 = w3_ref.shape[1]
    h4 = w4_ref.shape[1]

    b = bias_ref[...]      # (4, BMAX) bf16, zero-padded rows
    x = state_ref[...]     # bf16 (cast done in the wrapper)

    # Layers 1-3: MXU accumulates in f32; bias + leaky_relu epilogue in bf16.
    a = jnp.dot(x, w1_ref[...], preferred_element_type=jnp.float32)
    a = _leaky_relu(a.astype(jnp.bfloat16) + b[0, :h1])

    a = jnp.dot(a, w2_ref[...], preferred_element_type=jnp.float32)
    a = _leaky_relu(a.astype(jnp.bfloat16) + b[1, :h2])

    a = jnp.dot(a, w3_ref[...], preferred_element_type=jnp.float32)
    a = _leaky_relu(a.astype(jnp.bfloat16) + b[2, :h3])

    # Final layer: f32 bias add + tanh (EUP), bf16 store.
    # Padded output columns see tanh(0) = 0 and are sliced off in the wrapper.
    a = jnp.dot(a, w4_ref[...], preferred_element_type=jnp.float32)
    a = a + b[3, :h4].astype(jnp.float32)
    out_ref[...] = jnp.tanh(a).astype(out_ref.dtype)


def pack_params(params, action_size):
    """bf16 weights, lane-dense-padded fc4, biases packed into one operand."""
    out_pad = _round_up(max(action_size, 128), 128)

    w1 = params["w1"].astype(jnp.bfloat16)
    w2 = params["w2"].astype(jnp.bfloat16)
    w3 = params["w3"].astype(jnp.bfloat16)
    w4 = jnp.zeros((params["w4"].shape[0], out_pad), jnp.bfloat16)
    w4 = w4.at[:, :action_size].set(params["w4"].astype(jnp.bfloat16))

    bmax = max(w1.shape[1], w2.shape[1], w3.shape[1], out_pad)
    bias = jnp.zeros((4, bmax), jnp.bfloat16)
    bias = bias.at[0, : w1.shape[1]].set(params["b1"].astype(jnp.bfloat16))
    bias = bias.at[1, : w2.shape[1]].set(params["b2"].astype(jnp.bfloat16))
    bias = bias.at[2, : w3.shape[1]].set(params["b3"].astype(jnp.bfloat16))
    bias = bias.at[3, :action_size].set(params["b4"].astype(jnp.bfloat16))

    return {"w1": w1, "w2": w2, "w3": w3, "w4": w4, "bias": bias}


def actor_forward(state, packed, action_size):
    """state: (B, state_size) f32; packed: output of pack_params(). Returns f32."""
    B, S = state.shape
    w1, w2, w3, w4 = packed["w1"], packed["w2"], packed["w3"], packed["w4"]
    bias = packed["bias"]
    out_pad = w4.shape[1]

    # Batch tile: a single grid step up to 1024 rows (amortizes per-step
    # overhead + MXU weight push); 512-row tiles for very large batches, which
    # keeps the f32 intermediates + double-buffered IO well under v7x's VMEM.
    if B <= 1024:
        tb = max(8, _round_up(B, 8))
    else:
        tb = 512
    bp = _round_up(B, tb)

    # Cast the input to bf16 in the wrapper: halves the state HBM->VMEM DMA
    # and removes a VPU cast from the serial chain before the first matmul.
    state = state.astype(jnp.bfloat16)
    if bp != B:
        state = jnp.pad(state, ((0, bp - B), (0, 0)))

    grid_steps = bp // tb
    dim_sem = ("parallel",) if grid_steps >= 2 else ("arbitrary",)

    def resident(a):
        # Weights/bias: constant block index -> stay resident in VMEM, no
        # re-DMA across batch-grid steps.
        return pl.BlockSpec(a.shape, lambda i, _nd=a.ndim: (0,) * _nd)

    out = pl.pallas_call(
        actor_kernel,
        out_shape=jax.ShapeDtypeStruct((bp, out_pad), jnp.bfloat16),
        grid=(grid_steps,),
        in_specs=[
            pl.BlockSpec((tb, S), lambda i: (i, 0)),   # state: tiled on batch
            resident(w1), resident(w2), resident(w3), resident(w4),
            resident(bias),
        ],
        out_specs=pl.BlockSpec((tb, out_pad), lambda i: (i, 0)),
        compiler_params=pltpu.CompilerParams(
            dimension_semantics=dim_sem,
            vmem_limit_bytes=32 << 20,
        ),
    )(state, w1, w2, w3, w4, bias)

    return out[:B, :action_size].astype(jnp.float32)


def init_params(key, state_size, action_size,
                fc1_units=512, fc2_units=512, fc3_units=512):
    """Deterministic init mirroring ActorNetwork.reset_parameters().

    hidden_init uses fan_in = weight.size()[0] = out_features, so
    lim_i = 1/sqrt(fc_i_units); fc4 weight uses U(-3e-3, 3e-3).  Biases are
    NOT touched by reset_parameters(), so they keep PyTorch's default Linear
    init: U(-1/sqrt(in_features), 1/sqrt(in_features)).
    """
    ks = jax.random.split(key, 8)

    def w_uniform(k, in_f, out_f, lim):
        return jax.random.uniform(k, (in_f, out_f), jnp.float32, -lim, lim)

    def b_uniform(k, in_f, out_f):
        lim = 1.0 / jnp.sqrt(in_f)
        return jax.random.uniform(k, (out_f,), jnp.float32, -lim, lim)

    return {
        "w1": w_uniform(ks[0], state_size, fc1_units, 1.0 / jnp.sqrt(fc1_units)),
        "b1": b_uniform(ks[1], state_size, fc1_units),
        "w2": w_uniform(ks[2], fc1_units, fc2_units, 1.0 / jnp.sqrt(fc2_units)),
        "b2": b_uniform(ks[3], fc1_units, fc2_units),
        "w3": w_uniform(ks[4], fc2_units, fc3_units, 1.0 / jnp.sqrt(fc3_units)),
        "b3": b_uniform(ks[5], fc2_units, fc3_units),
        "w4": w_uniform(ks[6], fc3_units, action_size, 3e-3),
        "b4": b_uniform(ks[7], fc3_units, action_size),
    }


def actor_forward_ref(state, p):
    """Pure-JAX f32 reference for the correctness check."""
    h = jnp.maximum(state @ p["w1"] + p["b1"], LEAKY_SLOPE * (state @ p["w1"] + p["b1"]))
    h = jnp.maximum(h @ p["w2"] + p["b2"], LEAKY_SLOPE * (h @ p["w2"] + p["b2"]))
    h = jnp.maximum(h @ p["w3"] + p["b3"], LEAKY_SLOPE * (h @ p["w3"] + p["b3"]))
    return jnp.tanh(h @ p["w4"] + p["b4"])


if __name__ == "__main__":
    key = jax.random.PRNGKey(0)
    k_param, k_state = jax.random.split(key)

    batch = 8
    state_size = 32
    action_size = 4
    fc_units = 512

    params = init_params(k_param, state_size, action_size,
                         fc1_units=fc_units, fc2_units=fc_units, fc3_units=fc_units)
    state = jax.random.normal(k_state, (batch, state_size), jnp.float32)

    packed = pack_params(params, action_size)
    out = actor_forward(state, packed, action_size)
    out = jax.block_until_ready(out)

    ref = actor_forward_ref(state, params)
    assert out.shape == (batch, action_size)
    assert bool(jnp.all(jnp.abs(out) <= 1.0 + 1e-6))
    # bf16 weights/activations/epilogue with f32 accumulation -> relaxed tol.
    assert jnp.allclose(out, ref, atol=3e-2, rtol=3e-2), \
        f"max abs err = {float(jnp.max(jnp.abs(out - ref)))}"

    print("KERNEL_OK")
</pallas_src>

<mosaic_0001>
module attributes {stable_mosaic.version = 11 : i64} {
  func.func @actor_kernel(%arg0: i32, %arg1: memref<8x32xbf16, #tpu.memory_space<vmem>>, %arg2: memref<32x512xbf16, #tpu.memory_space<vmem>>, %arg3: memref<512x512xbf16, #tpu.memory_space<vmem>>, %arg4: memref<512x512xbf16, #tpu.memory_space<vmem>>, %arg5: memref<512x128xbf16, #tpu.memory_space<vmem>>, %arg6: memref<4x512xbf16, #tpu.memory_space<vmem>>, %arg7: memref<8x128xbf16, #tpu.memory_space<vmem>>) attributes {dimension_semantics = [#tpu.dimension_semantics<arbitrary>], iteration_bounds = array<i64: 1>, scalar_prefetch = 0 : i64, scratch_operands = 0 : i64, tpu.core_type = #tpu.core_type<tc>, window_params = [{transform_indices = @transform_0, window_bounds = array<i64: 8, 32>}, {pipeline_mode = #tpu.pipeline_mode<synchronous>, transform_indices = @transform_1, window_bounds = array<i64: 32, 512>}, {pipeline_mode = #tpu.pipeline_mode<synchronous>, transform_indices = @transform_2, window_bounds = array<i64: 512, 512>}, {pipeline_mode = #tpu.pipeline_mode<synchronous>, transform_indices = @transform_3, window_bounds = array<i64: 512, 512>}, {pipeline_mode = #tpu.pipeline_mode<synchronous>, transform_indices = @transform_4, window_bounds = array<i64: 512, 128>}, {pipeline_mode = #tpu.pipeline_mode<synchronous>, transform_indices = @transform_5, window_bounds = array<i64: 4, 512>}, {transform_indices = @transform_6, window_bounds = array<i64: 8, 128>}]} {
    %c0 = arith.constant 0 : index
    %c0_0 = arith.constant 0 : index
    %0 = vector.load %arg6[%c0, %c0_0] : memref<4x512xbf16, #tpu.memory_space<vmem>>, vector<4x512xbf16>
    %c0_1 = arith.constant 0 : index
    %c0_2 = arith.constant 0 : index
    %1 = vector.load %arg1[%c0_1, %c0_2] : memref<8x32xbf16, #tpu.memory_space<vmem>>, vector<8x32xbf16>
    %c0_3 = arith.constant 0 : index
    %c0_4 = arith.constant 0 : index
    %2 = vector.load %arg2[%c0_3, %c0_4] : memref<32x512xbf16, #tpu.memory_space<vmem>>, vector<32x512xbf16>
    %cst = arith.constant dense<0.000000e+00> : vector<8x512xf32>
    %3 = tpu.matmul %1, %2, %cst {dimension_numbers = #tpu.dot_dimension_numbers<[1], [0], [0], [1], [0, 0, 1, 1], [], []>} : vector<8x32xbf16>, vector<32x512xbf16>, vector<8x512xf32> -> vector<8x512xf32>
    %4 = arith.truncf %3 : vector<8x512xf32> to vector<8x512xbf16>
    %5 = vector.extract_strided_slice %0 {offsets = [0, 0], sizes = [1, 512], strides = [1, 1]} : vector<4x512xbf16> to vector<1x512xbf16>
    %6 = vector.shape_cast %5 : vector<1x512xbf16> to vector<512xbf16>
    %7 = vector.shape_cast %6 : vector<512xbf16> to vector<1x512xbf16>
    %8 = vector.broadcast %7 : vector<1x512xbf16> to vector<8x512xbf16>
    %9 = arith.addf %4, %8 : vector<8x512xbf16>
    %cst_5 = arith.constant 1.000980e-02 : bf16
    %10 = vector.broadcast %cst_5 : bf16 to vector<8x512xbf16>
    %11 = arith.mulf %10, %9 : vector<8x512xbf16>
    %12 = arith.maximumf %9, %11 : vector<8x512xbf16>
    %c0_6 = arith.constant 0 : index
    %c0_7 = arith.constant 0 : index
    %13 = vector.load %arg3[%c0_6, %c0_7] : memref<512x512xbf16, #tpu.memory_space<vmem>>, vector<512x512xbf16>
    %cst_8 = arith.constant dense<0.000000e+00> : vector<8x512xf32>
    %14 = tpu.matmul %12, %13, %cst_8 {dimension_numbers = #tpu.dot_dimension_numbers<[1], [0], [0], [1], [0, 0, 1, 1], [], []>} : vector<8x512xbf16>, vector<512x512xbf16>, vector<8x512xf32> -> vector<8x512xf32>
    %15 = arith.truncf %14 : vector<8x512xf32> to vector<8x512xbf16>
    %16 = vector.extract_strided_slice %0 {offsets = [1, 0], sizes = [1, 512], strides = [1, 1]} : vector<4x512xbf16> to vector<1x512xbf16>
    %17 = vector.shape_cast %16 : vector<1x512xbf16> to vector<512xbf16>
    %18 = vector.shape_cast %17 : vector<512xbf16> to vector<1x512xbf16>
    %19 = vector.broadcast %18 : vector<1x512xbf16> to vector<8x512xbf16>
    %20 = arith.addf %15, %19 : vector<8x512xbf16>
    %cst_9 = arith.constant 1.000980e-02 : bf16
    %21 = vector.broadcast %cst_9 : bf16 to vector<8x512xbf16>
    %22 = arith.mulf %21, %20 : vector<8x512xbf16>
    %23 = arith.maximumf %20, %22 : vector<8x512xbf16>
    %c0_10 = arith.constant 0 : index
    %c0_11 = arith.constant 0 : index
    %24 = vector.load %arg4[%c0_10, %c0_11] : memref<512x512xbf16, #tpu.memory_space<vmem>>, vector<512x512xbf16>
    %cst_12 = arith.constant dense<0.000000e+00> : vector<8x512xf32>
    %25 = tpu.matmul %23, %24, %cst_12 {dimension_numbers = #tpu.dot_dimension_numbers<[1], [0], [0], [1], [0, 0, 1, 1], [], []>} : vector<8x512xbf16>, vector<512x512xbf16>, vector<8x512xf32> -> vector<8x512xf32>
    %26 = arith.truncf %25 : vector<8x512xf32> to vector<8x512xbf16>
    %27 = vector.extract_strided_slice %0 {offsets = [2, 0], sizes = [1, 512], strides = [1, 1]} : vector<4x512xbf16> to vector<1x512xbf16>
    %28 = vector.shape_cast %27 : vector<1x512xbf16> to vector<512xbf16>
    %29 = vector.shape_cast %28 : vector<512xbf16> to vector<1x512xbf16>
    %30 = vector.broadcast %29 : vector<1x512xbf16> to vector<8x512xbf16>
    %31 = arith.addf %26, %30 : vector<8x512xbf16>
    %cst_13 = arith.constant 1.000980e-02 : bf16
    %32 = vector.broadcast %cst_13 : bf16 to vector<8x512xbf16>
    %33 = arith.mulf %32, %31 : vector<8x512xbf16>
    %34 = arith.maximumf %31, %33 : vector<8x512xbf16>
    %c0_14 = arith.constant 0 : index
    %c0_15 = arith.constant 0 : index
    %35 = vector.load %arg5[%c0_14, %c0_15] : memref<512x128xbf16, #tpu.memory_space<vmem>>, vector<512x128xbf16>
    %cst_16 = arith.constant dense<0.000000e+00> : vector<8x128xf32>
    %36 = tpu.matmul %34, %35, %cst_16 {dimension_numbers = #tpu.dot_dimension_numbers<[1], [0], [0], [1], [0, 0, 1, 1], [], []>} : vector<8x512xbf16>, vector<512x128xbf16>, vector<8x128xf32> -> vector<8x128xf32>
    %37 = vector.extract_strided_slice %0 {offsets = [3, 0], sizes = [1, 128], strides = [1, 1]} : vector<4x512xbf16> to vector<1x128xbf16>
    %38 = vector.shape_cast %37 : vector<1x128xbf16> to vector<128xbf16>
    %39 = arith.extf %38 : vector<128xbf16> to vector<128xf32>
    %40 = vector.shape_cast %39 : vector<128xf32> to vector<1x128xf32>
    %41 = vector.broadcast %40 : vector<1x128xf32> to vector<8x128xf32>
    %42 = arith.addf %36, %41 : vector<8x128xf32>
    %43 = math.tanh %42 : vector<8x128xf32>
    %44 = arith.truncf %43 : vector<8x128xf32> to vector<8x128xbf16>
    %c0_17 = arith.constant 0 : index
    %c0_18 = arith.constant 0 : index
    %45 = vector.load %arg7[%c0_17, %c0_18] : memref<8x128xbf16, #tpu.memory_space<vmem>>, vector<8x128xbf16>
    tpu.vector_store %arg7[%c0_17, %c0_18], %44 {strides = array<i32>} : memref<8x128xbf16, #tpu.memory_space<vmem>>, vector<8x128xbf16>,
    return
  }
  func.func @transform_0(%arg0: i32) -> (i32, i32) {
    %c0_i32 = arith.constant 0 : i32
    %c0_i32_0 = arith.constant 0 : i32
    return %arg0, %c0_i32 : i32, i32
  }
  func.func @transform_1(%arg0: i32) -> (i32, i32) {
    %c0_i32 = arith.constant 0 : i32
    %c0_i32_0 = arith.constant 0 : i32
    %c0_i32_1 = arith.constant 0 : i32
    return %c0_i32, %c0_i32_0 : i32, i32
  }
  func.func @transform_2(%arg0: i32) -> (i32, i32) {
    %c0_i32 = arith.constant 0 : i32
    %c0_i32_0 = arith.constant 0 : i32
    %c0_i32_1 = arith.constant 0 : i32
    return %c0_i32, %c0_i32_0 : i32, i32
  }
  func.func @transform_3(%arg0: i32) -> (i32, i32) {
    %c0_i32 = arith.constant 0 : i32
    %c0_i32_0 = arith.constant 0 : i32
    %c0_i32_1 = arith.constant 0 : i32
    return %c0_i32, %c0_i32_0 : i32, i32
  }
  func.func @transform_4(%arg0: i32) -> (i32, i32) {
    %c0_i32 = arith.constant 0 : i32
    %c0_i32_0 = arith.constant 0 : i32
    %c0_i32_1 = arith.constant 0 : i32
    return %c0_i32, %c0_i32_0 : i32, i32
  }
  func.func @transform_5(%arg0: i32) -> (i32, i32) {
    %c0_i32 = arith.constant 0 : i32
    %c0_i32_0 = arith.constant 0 : i32
    %c0_i32_1 = arith.constant 0 : i32
    return %c0_i32, %c0_i32_0 : i32, i32
  }
  func.func @transform_6(%arg0: i32) -> (i32, i32) {
    %c0_i32 = arith.constant 0 : i32
    %c0_i32_0 = arith.constant 0 : i32
    return %arg0, %c0_i32 : i32, i32
  }
}

</mosaic_0001>

<llo_original>
// kernel: tpu_custom_call.1
$region0: #{tpu_custom_call.1}
  #allocation0 [shape = 'u32[]', space=smem, size = 0x4, offset = 0x4, fixed_abs, tag = 'smem constant byte address 0x4 - core index']
  #allocation1 [shape = 'u32[144,128]{1,0:T(1,128)}', space=vmem, size = 0x12000, scoped, tag = 'internal scratch']
  %s0 = inlined_call_operand.hbm [shape: bf16[8,32], index: 0, kind: input, shape index: {}]
  %s1 = inlined_call_operand.hbm [shape: bf16[32,512], index: 1, kind: input, shape index: {}]
  %s2 = inlined_call_operand.hbm [shape: bf16[512,512], index: 2, kind: input, shape index: {}]
  %s3 = inlined_call_operand.hbm [shape: bf16[512,512], index: 3, kind: input, shape index: {}]
  %s4 = inlined_call_operand.hbm [shape: bf16[512,128], index: 4, kind: input, shape index: {}]
  %s5 = inlined_call_operand.vmem [shape: bf16[4,512], index: 5, kind: input, shape index: {}]
  %s6 = inlined_call_operand.hbm [shape: bf16[8,128], index: 6, kind: output, shape index: {}]
  %s7 = sld [smem:[#allocation0]]
  $region54: #{tpu_custom_call.1} parent=0
    _
  %s9 = ssub.s32 1, %s7
  %s10 = scalar_select 0, %s9, %s7
  $region1: #{tpu_custom_call.1} parent=0
    #allocation2 [shape = 'u8[2048]{0}', space=vmem, size = 0x800, scoped, tag = 'input window, operand 0, single buffered']
    #allocation3 [shape = 's32[1]{0}', space=sflag, size = 0x4, scoped, tag = 'scoped memory for tpu_custom_call.1']
    #allocation4 [shape = 's32[1]{0}', space=sflag, size = 0x4, scoped, tag = 'scoped memory for tpu_custom_call.1']
    #allocation5 [shape = 'u8[32768]{0}', space=vmem, size = 0x8000, scoped, tag = 'input window, operand 1, single buffered']
    #allocation6 [shape = 's32[1]{0}', space=sflag, size = 0x4, scoped, tag = 'scoped memory for tpu_custom_call.1']
    #allocation7 [shape = 'u8[524288]{0}', space=vmem, size = 0x80000, scoped, tag = 'input window, operand 2, single buffered']
    #allocation8 [shape = 'u8[524288]{0}', space=vmem, size = 0x80000, scoped, tag = 'input window, operand 3, single buffered']
    #allocation9 [shape = 's32[1]{0}', space=sflag, size = 0x4, scoped, tag = 'scoped memory for tpu_custom_call.1']
    #allocation10 [shape = 'u8[131072]{0}', space=vmem, size = 0x20000, scoped, tag = 'input window, operand 4, single buffered']
    #allocation11 [shape = 'u8[2048]{0}', space=vmem, size = 0x800, scoped, tag = 'output window, operand 0, single buffered']
    %11 = vsyncpa [#allocation3], 0
    %12 = vsyncpa [#allocation6], 0
    %13 = vsyncpa [#allocation9], 0
    %14 = vsyncpa [#allocation4], 0
    // Predicated region
    $region2: #{tpu_custom_call.1} parent=1 // pred_check
      _
    $region3: #{tpu_custom_call.1} parent=1 // pred_check_branch
      %16 = sbr.rel (0) target = $region5
    $region4: #{tpu_custom_call.1} parent=1 // pred_region
      %s18 = ssub.s32 64, 64
      %19 = vsyncadd [#allocation3], %s18
      %s21 = sshll.u32 [#allocation2], 4
      %s22 = int_to_ptr.vmem [resolvable:$true] %s21
      %24 = dma.hbm_to_vmem [thread:$0]  %s0, 64, %s22, [#allocation3]
    $region5: #{tpu_custom_call.1} parent=1 // pred_fallthru
      _
    // Predicated region
    $region6: #{tpu_custom_call.1} parent=1 // pred_check
      _
    $region7: #{tpu_custom_call.1} parent=1 // pred_check_branch
      %26 = sbr.rel (0) target = $region9
    $region8: #{tpu_custom_call.1} parent=1 // pred_region
      %s28 = ssub.s32 1024, 1024
      %29 = vsyncadd [#allocation6], %s28
      %s30 = sshll.u32 [#allocation5], 4
      %s31 = int_to_ptr.vmem [resolvable:$true] %s30
      %36 = dma.hbm_to_vmem [thread:$0]  %s1, 1024, %s31, [#allocation6], 256, 256, 16
    $region9: #{tpu_custom_call.1} parent=1 // pred_fallthru
      _
    // Predicated region
    $region10: #{tpu_custom_call.1} parent=1 // pred_check
      _
    $region11: #{tpu_custom_call.1} parent=1 // pred_check_branch
      %38 = sbr.rel (0) target = $region13
    $region12: #{tpu_custom_call.1} parent=1 // pred_region
      %s40 = ssub.s32 16384, 16384
      %41 = vsyncadd [#allocation6], %s40
      %s42 = sshll.u32 [#allocation7], 4
      %s43 = int_to_ptr.vmem [resolvable:$true] %s42
      %48 = dma.hbm_to_vmem [thread:$0]  %s2, 16384, %s43, [#allocation6], 256, 256, 16
    $region13: #{tpu_custom_call.1} parent=1 // pred_fallthru
      _
    // Predicated region
    $region14: #{tpu_custom_call.1} parent=1 // pred_check
      _
    $region15: #{tpu_custom_call.1} parent=1 // pred_check_branch
      %50 = sbr.rel (0) target = $region17
    $region16: #{tpu_custom_call.1} parent=1 // pred_region
      %s52 = ssub.s32 16384, 16384
      %53 = vsyncadd [#allocation9], %s52
      %s54 = sshll.u32 [#allocation8], 4
      %s55 = int_to_ptr.vmem [resolvable:$true] %s54
      %60 = dma.hbm_to_vmem [thread:$0]  %s3, 16384, %s55, [#allocation9], 256, 256, 16
    $region17: #{tpu_custom_call.1} parent=1 // pred_fallthru
      _
    // Predicated region
    $region18: #{tpu_custom_call.1} parent=1 // pred_check
      _
    $region19: #{tpu_custom_call.1} parent=1 // pred_check_branch
      %62 = sbr.rel (0) target = $region21
    $region20: #{tpu_custom_call.1} parent=1 // pred_region
      %s64 = ssub.s32 4096, 4096
      %65 = vsyncadd [#allocation9], %s64
      %s66 = sshll.u32 [#allocation10], 4
      %s67 = int_to_ptr.vmem [resolvable:$true] %s66
      %72 = dma.hbm_to_vmem [thread:$0]  %s4, 4096, %s67, [#allocation9], 64, 64, 4
    $region21: #{tpu_custom_call.1} parent=1 // pred_fallthru
      _
    // Predicated region
    $region22: #{tpu_custom_call.1} parent=1 // pred_check
      _
    $region23: #{tpu_custom_call.1} parent=1 // pred_check_branch
      %74 = sbr.rel (0) target = $region25
    $region24: #{tpu_custom_call.1} parent=1 // pred_region
      _
    $region25: #{tpu_custom_call.1} parent=1 // pred_fallthru
      _
    // Predicated region
    $region26: #{tpu_custom_call.1} parent=1 // pred_check
      _
    $region27: #{tpu_custom_call.1} parent=1 // pred_check_branch
      %76 = sbr.rel (0) target = $region29
    $region28: #{tpu_custom_call.1} parent=1 // pred_region
      %77 = dma.done [#allocation3], 64
    $region29: #{tpu_custom_call.1} parent=1 // pred_fallthru
      _
    // Predicated region
    $region30: #{tpu_custom_call.1} parent=1 // pred_check
      _
    $region31: #{tpu_custom_call.1} parent=1 // pred_check_branch
      %79 = sbr.rel (0) target = $region33
    $region32: #{tpu_custom_call.1} parent=1 // pred_region
      %80 = dma.done [#allocation6], 1024
    $region33: #{tpu_custom_call.1} parent=1 // pred_fallthru
      _
    // Predicated region
    $region34: #{tpu_custom_call.1} parent=1 // pred_check
      _
    $region35: #{tpu_custom_call.1} parent=1 // pred_check_branch
      %82 = sbr.rel (0) target = $region37
    $region36: #{tpu_custom_call.1} parent=1 // pred_region
      %83 = dma.done [#allocation6], 16384
    $region37: #{tpu_custom_call.1} parent=1 // pred_fallthru
      _
    // Predicated region
    $region38: #{tpu_custom_call.1} parent=1 // pred_check
      _
    $region39: #{tpu_custom_call.1} parent=1 // pred_check_branch
      %85 = sbr.rel (0) target = $region41
    $region40: #{tpu_custom_call.1} parent=1 // pred_region
      %86 = dma.done [#allocation9], 16384
    $region41: #{tpu_custom_call.1} parent=1 // pred_fallthru
      _
    // Predicated region
    $region42: #{tpu_custom_call.1} parent=1 // pred_check
      _
    $region43: #{tpu_custom_call.1} parent=1 // pred_check_branch
      %88 = sbr.rel (0) target = $region45
    $region44: #{tpu_custom_call.1} parent=1 // pred_region
      %89 = dma.done [#allocation9], 4096
    $region45: #{tpu_custom_call.1} parent=1 // pred_fallthru
      _
    %v92 = vld [vmem:[%s5] sm:$0xff]
    %v93 = vld [vmem:[#allocation2] sm:$0xf]
    %v94 = vld [vmem:[#allocation5] sm:$0xff]
    %v95 = vld [vmem:[#allocation5 + $0x8] sm:$0xff]
    %v96 = vld [vmem:[#allocation5 + $0x10] sm:$0xff]
    %v97 = vld [vmem:[#allocation5 + $0x18] sm:$0xff]
    %v98 = vld [vmem:[#allocation5 + $0x20] sm:$0xff]
    %v99 = vld [vmem:[#allocation5 + $0x28] sm:$0xff]
    %v100 = vld [vmem:[#allocation5 + $0x30] sm:$0xff]
    %v101 = vld [vmem:[#allocation5 + $0x38] sm:$0xff]
    %v110 = vunpack.c.l.b16 %v94
    %v111 = vunpack.c.h.b16 %v94
    %v112 = vunpack.c.l.b16 %v95
    %v113 = vunpack.c.h.b16 %v95
    %v114 = vunpack.c.l.b16 %v96
    %v115 = vunpack.c.h.b16 %v96
    %v116 = vunpack.c.l.b16 %v97
    %v117 = vunpack.c.h.b16 %v97
    %v118 = vunpack.c.l.b16 %v98
    %v119 = vunpack.c.h.b16 %v98
    %v120 = vunpack.c.l.b16 %v99
    %v121 = vunpack.c.h.b16 %v99
    %v122 = vunpack.c.l.b16 %v100
    %v123 = vunpack.c.h.b16 %v100
    %v124 = vunpack.c.l.b16 %v101
    %v125 = vunpack.c.h.b16 %v101
    %v126 = vpack.c.b16 %v114, %v110
    %v127 = vpack.c.b16 %v115, %v111
    %v128 = vpack.c.b16 %v116, %v112
    %v129 = vpack.c.b16 %v117, %v113
    %v130 = vpack.c.b16 %v122, %v118
    %v131 = vpack.c.b16 %v123, %v119
    %v132 = vpack.c.b16 %v124, %v120
    %v133 = vpack.c.b16 %v125, %v121
    %vm142 = vcmask 261120
    %v144 = vsel %vm142, %v93, 0
    %146 = vmatprep.subr.bf16.mxu0 %v127
    %147 = vmatpush1.bf16.msra.mxu0 %v126
    %148 = vmatprep.subr.bf16.mxu0 %v131
    %149 = vmatpush1.bf16.msra.mxu0 %v130
    %150 = vmatprep.subr.bf16.mxu0 0
    %151 = vmatpush1.bf16.msra.mxu0 0
    %152 = vmatprep.subr.bf16.mxu0 0
    %153 = vmatpush1.bf16.msra.mxu0 0
    %154 = vmatprep.subr.bf16.mxu0 0
    %155 = vmatpush1.bf16.msra.mxu0 0
    %156 = vmatprep.subr.bf16.mxu0 0
    %157 = vmatpush1.bf16.msra.mxu0 0
    %158 = vmatprep.subr.bf16.mxu0 0
    %159 = vmatpush1.bf16.msra.mxu0 0
    %160 = vmatprep.subr.bf16.mxu0 0
    %161 = vmatpush1.bf16.msra.mxu0 0
    %162 = vmatprep.subr.bf16.mxu0 0
    %163 = vmatpush1.bf16.msra.mxu0 0
    %164 = vmatprep.subr.bf16.mxu0 0
    %165 = vmatpush1.bf16.msra.mxu0 0
    %166 = vmatprep.subr.bf16.mxu0 0
    %167 = vmatpush1.bf16.msra.mxu0 0
    %168 = vmatprep.subr.bf16.mxu0 0
    %169 = vmatpush1.bf16.msra.mxu0 0
    %170 = vmatprep.subr.bf16.mxu0 0
    %171 = vmatpush1.bf16.msra.mxu0 0
    %172 = vmatprep.subr.bf16.mxu0 0
    %173 = vmatpush1.bf16.msra.mxu0 0
    %174 = vmatprep.subr.bf16.mxu0 0
    %175 = vmatpush1.bf16.msra.mxu0 0
    %176 = vmatprep.subr.bf16.mxu0 0
    %177 = vmatpush1.bf16.msra.mxu0 0
    %178 = vmatprep.mubr.bf16.mxu0 0
    %179 = vmatmul.mubr.bf16.gmra.mrb[0].mxu0 %v144
    %v180 = vpop.f32.mrb[0].mxu0
    %v181 = vadd.f32 0.0, %v180
    %v182 = vpop.f32.mrb[0].mxu0
    %v183 = vadd.f32 0.0, %v182
    %v184 = vpop.f32.mrb[0].mxu0
    %v185 = vpop.f32.mrb[0].mxu0
    %186 = vdwg.mxu0
    %187 = vmatprep.subr.bf16.mxu0 %v129
    %188 = vmatpush1.bf16.msra.mxu0 %v128
    %189 = vmatprep.subr.bf16.mxu0 %v133
    %190 = vmatpush1.bf16.msra.mxu0 %v132
    %191 = vmatprep.subr.bf16.mxu0 0
    %192 = vmatpush1.bf16.msra.mxu0 0
    %193 = vmatprep.subr.bf16.mxu0 0
    %194 = vmatpush1.bf16.msra.mxu0 0
    %195 = vmatprep.subr.bf16.mxu0 0
    %196 = vmatpush1.bf16.msra.mxu0 0
    %197 = vmatprep.subr.bf16.mxu0 0
    %198 = vmatpush1.bf16.msra.mxu0 0
    %199 = vmatprep.subr.bf16.mxu0 0
    %200 = vmatpush1.bf16.msra.mxu0 0
    %201 = vmatprep.subr.bf16.mxu0 0
    %202 = vmatpush1.bf16.msra.mxu0 0
    %203 = vmatprep.subr.bf16.mxu0 0
    %204 = vmatpush1.bf16.msra.mxu0 0
    %205 = vmatprep.subr.bf16.mxu0 0
    %206 = vmatpush1.bf16.msra.mxu0 0
    %207 = vmatprep.subr.bf16.mxu0 0
    %208 = vmatpush1.bf16.msra.mxu0 0
    %209 = vmatprep.subr.bf16.mxu0 0
    %210 = vmatpush1.bf16.msra.mxu0 0
    %211 = vmatprep.subr.bf16.mxu0 0
    %212 = vmatpush1.bf16.msra.mxu0 0
    %213 = vmatprep.subr.bf16.mxu0 0
    %214 = vmatpush1.bf16.msra.mxu0 0
    %215 = vmatprep.subr.bf16.mxu0 0
    %216 = vmatpush1.bf16.msra.mxu0 0
    %217 = vmatprep.subr.bf16.mxu0 0
    %218 = vmatpush1.bf16.msra.mxu0 0
    %219 = vmatprep.mubr.bf16.mxu0 0
    %220 = vmatmul.mubr.bf16.gmra.mrb[0].mxu0 %v144
    %v221 = vpop.f32.mrb[0].mxu0
    %v222 = vadd.f32 0.0, %v221
    %v223 = vpop.f32.mrb[0].mxu0
    %v224 = vadd.f32 0.0, %v223
    %v225 = vpop.f32.mrb[0].mxu0
    %v226 = vpop.f32.mrb[0].mxu0
    %227 = vdwg.mxu0
    %v228 = vpack.c.bf16 %v181, %v181
    %v229 = vpack.c.bf16 %v183, %v183
    %v230 = vpack.c.bf16 %v222, %v222
    %v231 = vpack.c.bf16 %v224, %v224
    %v233 = vcombine.high %v92, %v92
    %v235 = vunpack.c.l.s4 1983009808
    %v236 = vunpack.c.0.s8 %v235
    %v237 = vlaneseq
    %v238 = vshrl.u32 %v237, 7
    %v239 = vsub.s32 %v236, %v238
    %v240 = vrot.slane %v92, %v239
    %v242 = vunpack.c.l.s4 1983009808
    %v243 = vunpack.c.0.s8 %v242
    %v244 = vlaneseq
    %v245 = vshrl.u32 %v244, 7
    %v246 = vsub.s32 %v243, %v245
    %v247 = vrot.slane %v233, %v246
    %v248 = vcombine.high %v240, %v240
    %v249 = vcombine.high %v247, %v247
    %v251 = vpack.i.b16 %v240, %v240
    %v253 = vlaneseq
    %v254 = vshrl.u32 %v253, 7
    %v255 = vsub.s32 0, %v254
    %v256 = vrot.slane %v251, %v255
    %v258 = vpack.i.b16 %v248, %v248
    %v260 = vlaneseq
    %v261 = vshrl.u32 %v260, 7
    %v262 = vsub.s32 0, %v261
    %v263 = vrot.slane %v258, %v262
    %v265 = vpack.i.b16 %v247, %v247
    %v267 = vlaneseq
    %v268 = vshrl.u32 %v267, 7
    %v269 = vsub.s32 0, %v268
    %v270 = vrot.slane %v265, %v269
    %v272 = vpack.i.b16 %v249, %v249
    %v274 = vlaneseq
    %v275 = vshrl.u32 %v274, 7
    %v276 = vsub.s32 0, %v275
    %v277 = vrot.slane %v272, %v276
    %v278 = vadd.bf16 %v228, %v256
    %v279 = vadd.bf16 %v229, %v263
    %v280 = vadd.bf16 %v230, %v270
    %v281 = vadd.bf16 %v231, %v277
    %v282 = vmul.bf16 %v278, 1009007652
    %v283 = vmul.bf16 %v279, 1009007652
    %v284 = vmul.bf16 %v280, 1009007652
    %v285 = vmul.bf16 %v281, 1009007652
    %v286 = vmax.bf16 %v278, %v282
    %v287 = vmax.bf16 %v279, %v283
    %v288 = vmax.bf16 %v280, %v284
    %v289 = vmax.bf16 %v281, %v285
    %v290 = vld [vmem:[#allocation7] sm:$0xff]
    %v291 = vld [vmem:[#allocation7 + $0x8] sm:$0xff]
    %v292 = vld [vmem:[#allocation7 + $0x10] sm:$0xff]
    %v293 = vld [vmem:[#allocation7 + $0x18] sm:$0xff]
    %v294 = vld [vmem:[#allocation7 + $0x20] sm:$0xff]
    %v295 = vld [vmem:[#allocation7 + $0x28] sm:$0xff]
    %v296 = vld [vmem:[#allocation7 + $0x30] sm:$0xff]
    %v297 = vld [vmem:[#allocation7 + $0x38] sm:$0xff]
    %v298 = vld [vmem:[#allocation7 + $0x40] sm:$0xff]
    %v299 = vld [vmem:[#allocation7 + $0x48] sm:$0xff]
    %v300 = vld [vmem:[#allocation7 + $0x50] sm:$0xff]
    %v301 = vld [vmem:[#allocation7 + $0x58] sm:$0xff]
    %v302 = vld [vmem:[#allocation7 + $0x60] sm:$0xff]
    %v303 = vld [vmem:[#allocation7 + $0x68] sm:$0xff]
    %v304 = vld [vmem:[#allocation7 + $0x70] sm:$0xff]
    %v305 = vld [vmem:[#allocation7 + $0x78] sm:$0xff]
    %v306 = vld [vmem:[#allocation7 + $0x80] sm:$0xff]
    %v307 = vld [vmem:[#allocation7 + $0x88] sm:$0xff]
    %v308 = vld [vmem:[#allocation7 + $0x90] sm:$0xff]
    %v309 = vld [vmem:[#allocation7 + $0x98] sm:$0xff]
    %v310 = vld [vmem:[#allocation7 + $0xa0] sm:$0xff]
    %v311 = vld [vmem:[#allocation7 + $0xa8] sm:$0xff]
    %v312 = vld [vmem:[#allocation7 + $0xb0] sm:$0xff]
    %v313 = vld [vmem:[#allocation7 + $0xb8] sm:$0xff]
    %v314 = vld [vmem:[#allocation7 + $0xc0] sm:$0xff]
    %v315 = vld [vmem:[#allocation7 + $0xc8] sm:$0xff]
    %v316 = vld [vmem:[#allocation7 + $0xd0] sm:$0xff]
    %v317 = vld [vmem:[#allocation7 + $0xd8] sm:$0xff]
    %v318 = vld [vmem:[#allocation7 + $0xe0] sm:$0xff]
    %v319 = vld [vmem:[#allocation7 + $0xe8] sm:$0xff]
    %v320 = vld [vmem:[#allocation7 + $0xf0] sm:$0xff]
    %v321 = vld [vmem:[#allocation7 + $0xf8] sm:$0xff]
    %v322 = vld [vmem:[#allocation7 + $0x100] sm:$0xff]
    %v323 = vld [vmem:[#allocation7 + $0x108] sm:$0xff]
    %v324 = vld [vmem:[#allocation7 + $0x110] sm:$0xff]
    %v325 = vld [vmem:[#allocation7 + $0x118] sm:$0xff]
    %v326 = vld [vmem:[#allocation7 + $0x120] sm:$0xff]
    %v327 = vld [vmem:[#allocation7 + $0x128] sm:$0xff]
    %v328 = vld [vmem:[#allocation7 + $0x130] sm:$0xff]
    %v329 = vld [vmem:[#allocation7 + $0x138] sm:$0xff]
    %v330 = vld [vmem:[#allocation7 + $0x140] sm:$0xff]
    %v331 = vld [vmem:[#allocation7 + $0x148] sm:$0xff]
    %v332 = vld [vmem:[#allocation7 + $0x150] sm:$0xff]
    %v333 = vld [vmem:[#allocation7 + $0x158] sm:$0xff]
    %v334 = vld [vmem:[#allocation7 + $0x160] sm:$0xff]
    %v335 = vld [vmem:[#allocation7 + $0x168] sm:$0xff]
    %v336 = vld [vmem:[#allocation7 + $0x170] sm:$0xff]
    %v337 = vld [vmem:[#allocation7 + $0x178] sm:$0xff]
    %v338 = vld [vmem:[#allocation7 + $0x180] sm:$0xff]
    %v339 = vld [vmem:[#allocation7 + $0x188] sm:$0xff]
    %v340 = vld [vmem:[#allocation7 + $0x190] sm:$0xff]
    %v341 = vld [vmem:[#allocation7 + $0x198] sm:$0xff]
    %v342 = vld [vmem:[#allocation7 + $0x1a0] sm:$0xff]
    %v343 = vld [vmem:[#allocation7 + $0x1a8] sm:$0xff]
    %v344 = vld [vmem:[#allocation7 + $0x1b0] sm:$0xff]
    %v345 = vld [vmem:[#allocation7 + $0x1b8] sm:$0xff]
    %v346 = vld [vmem:[#allocation7 + $0x1c0] sm:$0xff]
    %v347 = vld [vmem:[#allocation7 + $0x1c8] sm:$0xff]
    %v348 = vld [vmem:[#allocation7 + $0x1d0] sm:$0xff]
    %v349 = vld [vmem:[#allocation7 + $0x1d8] sm:$0xff]
    %v350 = vld [vmem:[#allocation7 + $0x1e0] sm:$0xff]
    %v351 = vld [vmem:[#allocation7 + $0x1e8] sm:$0xff]
    %v352 = vld [vmem:[#allocation7 + $0x1f0] sm:$0xff]
    %v353 = vld [vmem:[#allocation7 + $0x1f8] sm:$0xff]
    %v354 = vld [vmem:[#allocation7 + $0x200] sm:$0xff]
    %v355 = vld [vmem:[#allocation7 + $0x208] sm:$0xff]
    %v356 = vld [vmem:[#allocation7 + $0x210] sm:$0xff]
    %v357 = vld [vmem:[#allocation7 + $0x218] sm:$0xff]
    %v358 = vld [vmem:[#allocation7 + $0x220] sm:$0xff]
    %v359 = vld [vmem:[#allocation7 + $0x228] sm:$0xff]
    %v360 = vld [vmem:[#allocation7 + $0x230] sm:$0xff]
    %v361 = vld [vmem:[#allocation7 + $0x238] sm:$0xff]
    %v362 = vld [vmem:[#allocation7 + $0x240] sm:$0xff]
    %v363 = vld [vmem:[#allocation7 + $0x248] sm:$0xff]
    %v364 = vld [vmem:[#allocation7 + $0x250] sm:$0xff]
    %v365 = vld [vmem:[#allocation7 + $0x258] sm:$0xff]
    %v366 = vld [vmem:[#allocation7 + $0x260] sm:$0xff]
    %v367 = vld [vmem:[#allocation7 + $0x268] sm:$0xff]
    %v368 = vld [vmem:[#allocation7 + $0x270] sm:$0xff]
    %v369 = vld [vmem:[#allocation7 + $0x278] sm:$0xff]
    %v370 = vld [vmem:[#allocation7 + $0x280] sm:$0xff]
    %v371 = vld [vmem:[#allocation7 + $0x288] sm:$0xff]
    %v372 = vld [vmem:[#allocation7 + $0x290] sm:$0xff]
    %v373 = vld [vmem:[#allocation7 + $0x298] sm:$0xff]
    %v374 = vld [vmem:[#allocation7 + $0x2a0] sm:$0xff]
    %v375 = vld [vmem:[#allocation7 + $0x2a8] sm:$0xff]
    %v376 = vld [vmem:[#allocation7 + $0x2b0] sm:$0xff]
    %v377 = vld [vmem:[#allocation7 + $0x2b8] sm:$0xff]
    %v378 = vld [vmem:[#allocation7 + $0x2c0] sm:$0xff]
    %v379 = vld [vmem:[#allocation7 + $0x2c8] sm:$0xff]
    %v380 = vld [vmem:[#allocation7 + $0x2d0] sm:$0xff]
    %v381 = vld [vmem:[#allocation7 + $0x2d8] sm:$0xff]
    %v382 = vld [vmem:[#allocation7 + $0x2e0] sm:$0xff]
    %v383 = vld [vmem:[#allocation7 + $0x2e8] sm:$0xff]
    %v384 = vld [vmem:[#allocation7 + $0x2f0] sm:$0xff]
    %v385 = vld [vmem:[#allocation7 + $0x2f8] sm:$0xff]
    %v386 = vld [vmem:[#allocation7 + $0x300] sm:$0xff]
    %v387 = vld [vmem:[#allocation7 + $0x308] sm:$0xff]
    %v388 = vld [vmem:[#allocation7 + $0x310] sm:$0xff]
    %v389 = vld [vmem:[#allocation7 + $0x318] sm:$0xff]
    %v390 = vld [vmem:[#allocation7 + $0x320] sm:$0xff]
    %v391 = vld [vmem:[#allocation7 + $0x328] sm:$0xff]
    %v392 = vld [vmem:[#allocation7 + $0x330] sm:$0xff]
    %v393 = vld [vmem:[#allocation7 + $0x338] sm:$0xff]
    %v394 = vld [vmem:[#allocation7 + $0x340] sm:$0xff]
    %v395 = vld [vmem:[#allocation7 + $0x348] sm:$0xff]
    %v396 = vld [vmem:[#allocation7 + $0x350] sm:$0xff]
    %v397 = vld [vmem:[#allocation7 + $0x358] sm:$0xff]
    %v398 = vld [vmem:[#allocation7 + $0x360] sm:$0xff]
    %v399 = vld [vmem:[#allocation7 + $0x368] sm:$0xff]
    %v400 = vld [vmem:[#allocation7 + $0x370] sm:$0xff]
    %v401 = vld [vmem:[#allocation7 + $0x378] sm:$0xff]
    %v402 = vld [vmem:[#allocation7 + $0x380] sm:$0xff]
    %v403 = vld [vmem:[#allocation7 + $0x388] sm:$0xff]
    %v404 = vld [vmem:[#allocation7 + $0x390] sm:$0xff]
    %v405 = vld [vmem:[#allocation7 + $0x398] sm:$0xff]
    %v406 = vld [vmem:[#allocation7 + $0x3a0] sm:$0xff]
    %v407 = vld [vmem:[#allocation7 + $0x3a8] sm:$0xff]
    %v408 = vld [vmem:[#allocation7 + $0x3b0] sm:$0xff]
    %v409 = vld [vmem:[#allocation7 + $0x3b8] sm:$0xff]
    %v410 = vld [vmem:[#allocation7 + $0x3c0] sm:$0xff]
    %v411 = vld [vmem:[#allocation7 + $0x3c8] sm:$0xff]
    %v412 = vld [vmem:[#allocation7 + $0x3d0] sm:$0xff]
    %v413 = vld [vmem:[#allocation7 + $0x3d8] sm:$0xff]
    %v414 = vld [vmem:[#allocation7 + $0x3e0] sm:$0xff]
    %v415 = vld [vmem:[#allocation7 + $0x3e8] sm:$0xff]
    %v416 = vld [vmem:[#allocation7 + $0x3f0] sm:$0xff]
    %v417 = vld [vmem:[#allocation7 + $0x3f8] sm:$0xff]
    %v546 = vunpack.c.l.b16 %v290
    %v547 = vunpack.c.h.b16 %v290
    %v548 = vunpack.c.l.b16 %v291
    %v549 = vunpack.c.h.b16 %v291
    %v550 = vunpack.c.l.b16 %v292
    %v551 = vunpack.c.h.b16 %v292
    %v552 = vunpack.c.l.b16 %v293
    %v553 = vunpack.c.h.b16 %v293
    %v554 = vunpack.c.l.b16 %v294
    %v555 = vunpack.c.h.b16 %v294
    %v556 = vunpack.c.l.b16 %v295
    %v557 = vunpack.c.h.b16 %v295
    %v558 = vunpack.c.l.b16 %v296
    %v559 = vunpack.c.h.b16 %v296
    %v560 = vunpack.c.l.b16 %v297
    %v561 = vunpack.c.h.b16 %v297
    %v562 = vunpack.c.l.b16 %v298
    %v563 = vunpack.c.h.b16 %v298
    %v564 = vunpack.c.l.b16 %v299
    %v565 = vunpack.c.h.b16 %v299
    %v566 = vunpack.c.l.b16 %v300
    %v567 = vunpack.c.h.b16 %v300
    %v568 = vunpack.c.l.b16 %v301
    %v569 = vunpack.c.h.b16 %v301
    %v570 = vunpack.c.l.b16 %v302
    %v571 = vunpack.c.h.b16 %v302
    %v572 = vunpack.c.l.b16 %v303
    %v573 = vunpack.c.h.b16 %v303
    %v574 = vunpack.c.l.b16 %v304
    %v575 = vunpack.c.h.b16 %v304
    %v576 = vunpack.c.l.b16 %v305
    %v577 = vunpack.c.h.b16 %v305
    %v578 = vunpack.c.l.b16 %v306
    %v579 = vunpack.c.h.b16 %v306
    %v580 = vunpack.c.l.b16 %v307
    %v581 = vunpack.c.h.b16 %v307
    %v582 = vunpack.c.l.b16 %v308
    %v583 = vunpack.c.h.b16 %v308
    %v584 = vunpack.c.l.b16 %v309
    %v585 = vunpack.c.h.b16 %v309
    %v586 = vunpack.c.l.b16 %v310
    %v587 = vunpack.c.h.b16 %v310
    %v588 = vunpack.c.l.b16 %v311
    %v589 = vunpack.c.h.b16 %v311
    %v590 = vunpack.c.l.b16 %v312
    %v591 = vunpack.c.h.b16 %v312
    %v592 = vunpack.c.l.b16 %v313
    %v593 = vunpack.c.h.b16 %v313
    %v594 = vunpack.c.l.b16 %v314
    %v595 = vunpack.c.h.b16 %v314
    %v596 = vunpack.c.l.b16 %v315
    %v597 = vunpack.c.h.b16 %v315
    %v598 = vunpack.c.l.b16 %v316
    %v599 = vunpack.c.h.b16 %v316
    %v600 = vunpack.c.l.b16 %v317
    %v601 = vunpack.c.h.b16 %v317
    %v602 = vunpack.c.l.b16 %v318
    %v603 = vunpack.c.h.b16 %v318
    %v604 = vunpack.c.l.b16 %v319
    %v605 = vunpack.c.h.b16 %v319
    %v606 = vunpack.c.l.b16 %v320
    %v607 = vunpack.c.h.b16 %v320
    %v608 = vunpack.c.l.b16 %v321
    %v609 = vunpack.c.h.b16 %v321
    %v610 = vunpack.c.l.b16 %v322
    %v611 = vunpack.c.h.b16 %v322
    %v612 = vunpack.c.l.b16 %v323
    %v613 = vunpack.c.h.b16 %v323
    %v614 = vunpack.c.l.b16 %v324
    %v615 = vunpack.c.h.b16 %v324
    %v616 = vunpack.c.l.b16 %v325
    %v617 = vunpack.c.h.b16 %v325
    %v618 = vunpack.c.l.b16 %v326
    %v619 = vunpack.c.h.b16 %v326
    %v620 = vunpack.c.l.b16 %v327
    %v621 = vunpack.c.h.b16 %v327
    %v622 = vunpack.c.l.b16 %v328
    %v623 = vunpack.c.h.b16 %v328
    %v624 = vunpack.c.l.b16 %v329
    %v625 = vunpack.c.h.b16 %v329
    %v626 = vunpack.c.l.b16 %v330
    %v627 = vunpack.c.h.b16 %v330
    %v628 = vunpack.c.l.b16 %v331
    %v629 = vunpack.c.h.b16 %v331
    %v630 = vunpack.c.l.b16 %v332
    %v631 = vunpack.c.h.b16 %v332
    %v632 = vunpack.c.l.b16 %v333
    %v633 = vunpack.c.h.b16 %v333
    %v634 = vunpack.c.l.b16 %v334
    %v635 = vunpack.c.h.b16 %v334
    %v636 = vunpack.c.l.b16 %v335
    %v637 = vunpack.c.h.b16 %v335
    %v638 = vunpack.c.l.b16 %v336
    %v639 = vunpack.c.h.b16 %v336
    %v640 = vunpack.c.l.b16 %v337
    %v641 = vunpack.c.h.b16 %v337
    %v642 = vunpack.c.l.b16 %v338
    %v643 = vunpack.c.h.b16 %v338
    %v644 = vunpack.c.l.b16 %v339
    %v645 = vunpack.c.h.b16 %v339
    %v646 = vunpack.c.l.b16 %v340
    %v647 = vunpack.c.h.b16 %v340
    %v648 = vunpack.c.l.b16 %v341
    %v649 = vunpack.c.h.b16 %v341
    %v650 = vunpack.c.l.b16 %v342
    %v651 = vunpack.c.h.b16 %v342
    %v652 = vunpack.c.l.b16 %v343
    %v653 = vunpack.c.h.b16 %v343
    %v654 = vunpack.c.l.b16 %v344
    %v655 = vunpack.c.h.b16 %v344
    %v656 = vunpack.c.l.b16 %v345
    %v657 = vunpack.c.h.b16 %v345
    %v658 = vunpack.c.l.b16 %v346
    %v659 = vunpack.c.h.b16 %v346
    %v660 = vunpack.c.l.b16 %v347
    %v661 = vunpack.c.h.b16 %v347
    %v662 = vunpack.c.l.b16 %v348
    %v663 = vunpack.c.h.b16 %v348
    %v664 = vunpack.c.l.b16 %v349
    %v665 = vunpack.c.h.b16 %v349
    %v666 = vunpack.c.l.b16 %v350
    %v667 = vunpack.c.h.b16 %v350
    %v668 = vunpack.c.l.b16 %v351
    %v669 = vunpack.c.h.b16 %v351
    %v670 = vunpack.c.l.b16 %v352
    %v671 = vunpack.c.h.b16 %v352
    %v672 = vunpack.c.l.b16 %v353
    %v673 = vunpack.c.h.b16 %v353
    %v674 = vunpack.c.l.b16 %v354
    %v675 = vunpack.c.h.b16 %v354
    %v676 = vunpack.c.l.b16 %v355
    %v677 = vunpack.c.h.b16 %v355
    %v678 = vunpack.c.l.b16 %v356
    %v679 = vunpack.c.h.b16 %v356
    %v680 = vunpack.c.l.b16 %v357
    %v681 = vunpack.c.h.b16 %v357
    %v682 = vunpack.c.l.b16 %v358
    %v683 = vunpack.c.h.b16 %v358
    %v684 = vunpack.c.l.b16 %v359
    %v685 = vunpack.c.h.b16 %v359
    %v686 = vunpack.c.l.b16 %v360
    %v687 = vunpack.c.h.b16 %v360
    %v688 = vunpack.c.l.b16 %v361
    %v689 = vunpack.c.h.b16 %v361
    %v690 = vunpack.c.l.b16 %v362
    %v691 = vunpack.c.h.b16 %v362
    %v692 = vunpack.c.l.b16 %v363
    %v693 = vunpack.c.h.b16 %v363
    %v694 = vunpack.c.l.b16 %v364
    %v695 = vunpack.c.h.b16 %v364
    %v696 = vunpack.c.l.b16 %v365
    %v697 = vunpack.c.h.b16 %v365
    %v698 = vunpack.c.l.b16 %v366
    %v699 = vunpack.c.h.b16 %v366
    %v700 = vunpack.c.l.b16 %v367
    %v701 = vunpack.c.h.b16 %v367
    %v702 = vunpack.c.l.b16 %v368
    %v703 = vunpack.c.h.b16 %v368
    %v704 = vunpack.c.l.b16 %v369
    %v705 = vunpack.c.h.b16 %v369
    %v706 = vunpack.c.l.b16 %v370
    %v707 = vunpack.c.h.b16 %v370
    %v708 = vunpack.c.l.b16 %v371
    %v709 = vunpack.c.h.b16 %v371
    %v710 = vunpack.c.l.b16 %v372
    %v711 = vunpack.c.h.b16 %v372
    %v712 = vunpack.c.l.b16 %v373
    %v713 = vunpack.c.h.b16 %v373
    %v714 = vunpack.c.l.b16 %v374
    %v715 = vunpack.c.h.b16 %v374
    %v716 = vunpack.c.l.b16 %v375
    %v717 = vunpack.c.h.b16 %v375
    %v718 = vunpack.c.l.b16 %v376
    %v719 = vunpack.c.h.b16 %v376
    %v720 = vunpack.c.l.b16 %v377
    %v721 = vunpack.c.h.b16 %v377
    %v722 = vunpack.c.l.b16 %v378
    %v723 = vunpack.c.h.b16 %v378
    %v724 = vunpack.c.l.b16 %v379
    %v725 = vunpack.c.h.b16 %v379
    %v726 = vunpack.c.l.b16 %v380
    %v727 = vunpack.c.h.b16 %v380
    %v728 = vunpack.c.l.b16 %v381
    %v729 = vunpack.c.h.b16 %v381
    %v730 = vunpack.c.l.b16 %v382
    %v731 = vunpack.c.h.b16 %v382
    %v732 = vunpack.c.l.b16 %v383
    %v733 = vunpack.c.h.b16 %v383
    %v734 = vunpack.c.l.b16 %v384
    %v735 = vunpack.c.h.b16 %v384
    %v736 = vunpack.c.l.b16 %v385
    %v737 = vunpack.c.h.b16 %v385
    %v738 = vunpack.c.l.b16 %v386
    %v739 = vunpack.c.h.b16 %v386
    %v740 = vunpack.c.l.b16 %v387
    %v741 = vunpack.c.h.b16 %v387
    %v742 = vunpack.c.l.b16 %v388
    %v743 = vunpack.c.h.b16 %v388
    %v744 = vunpack.c.l.b16 %v389
    %v745 = vunpack.c.h.b16 %v389
    %v746 = vunpack.c.l.b16 %v390
    %v747 = vunpack.c.h.b16 %v390
    %v748 = vunpack.c.l.b16 %v391
    %v749 = vunpack.c.h.b16 %v391
    %v750 = vunpack.c.l.b16 %v392
    %v751 = vunpack.c.h.b16 %v392
    %v752 = vunpack.c.l.b16 %v393
    %v753 = vunpack.c.h.b16 %v393
    %v754 = vunpack.c.l.b16 %v394
    %v755 = vunpack.c.h.b16 %v394
    %v756 = vunpack.c.l.b16 %v395
    %v757 = vunpack.c.h.b16 %v395
    %v758 = vunpack.c.l.b16 %v396
    %v759 = vunpack.c.h.b16 %v396
    %v760 = vunpack.c.l.b16 %v397
    %v761 = vunpack.c.h.b16 %v397
    %v762 = vunpack.c.l.b16 %v398
    %v763 = vunpack.c.h.b16 %v398
    %v764 = vunpack.c.l.b16 %v399
    %v765 = vunpack.c.h.b16 %v399
    %v766 = vunpack.c.l.b16 %v400
    %v767 = vunpack.c.h.b16 %v400
    %v768 = vunpack.c.l.b16 %v401
    %v769 = vunpack.c.h.b16 %v401
    %v770 = vunpack.c.l.b16 %v402
    %v771 = vunpack.c.h.b16 %v402
    %v772 = vunpack.c.l.b16 %v403
    %v773 = vunpack.c.h.b16 %v403
    %v774 = vunpack.c.l.b16 %v404
    %v775 = vunpack.c.h.b16 %v404
    %v776 = vunpack.c.l.b16 %v405
    %v777 = vunpack.c.h.b16 %v405
    %v778 = vunpack.c.l.b16 %v406
    %v779 = vunpack.c.h.b16 %v406
    %v780 = vunpack.c.l.b16 %v407
    %v781 = vunpack.c.h.b16 %v407
    %v782 = vunpack.c.l.b16 %v408
    %v783 = vunpack.c.h.b16 %v408
    %v784 = vunpack.c.l.b16 %v409
    %v785 = vunpack.c.h.b16 %v409
    %v786 = vunpack.c.l.b16 %v410
    %v787 = vunpack.c.h.b16 %v410
    %v788 = vunpack.c.l.b16 %v411
    %v789 = vunpack.c.h.b16 %v411
    %v790 = vunpack.c.l.b16 %v412
    %v791 = vunpack.c.h.b16 %v412
    %v792 = vunpack.c.l.b16 %v413
    %v793 = vunpack.c.h.b16 %v413
    %v794 = vunpack.c.l.b16 %v414
    %v795 = vunpack.c.h.b16 %v414
    %v796 = vunpack.c.l.b16 %v415
    %v797 = vunpack.c.h.b16 %v415
    %v798 = vunpack.c.l.b16 %v416
    %v799 = vunpack.c.h.b16 %v416
    %v800 = vunpack.c.l.b16 %v417
    %v801 = vunpack.c.h.b16 %v417
    %v802 = vpack.c.b16 %v550, %v546
    %v803 = vpack.c.b16 %v551, %v547
    %v804 = vpack.c.b16 %v552, %v548
    %v805 = vpack.c.b16 %v553, %v549
    %v806 = vpack.c.b16 %v558, %v554
    %v807 = vpack.c.b16 %v559, %v555
    %v808 = vpack.c.b16 %v560, %v556
    %v809 = vpack.c.b16 %v561, %v557
    %v810 = vpack.c.b16 %v566, %v562
    %v811 = vpack.c.b16 %v567, %v563
    %v812 = vpack.c.b16 %v568, %v564
    %v813 = vpack.c.b16 %v569, %v565
    %v814 = vpack.c.b16 %v574, %v570
    %v815 = vpack.c.b16 %v575, %v571
    %v816 = vpack.c.b16 %v576, %v572
    %v817 = vpack.c.b16 %v577, %v573
    %v818 = vpack.c.b16 %v582, %v578
    %v819 = vpack.c.b16 %v583, %v579
    %v820 = vpack.c.b16 %v584, %v580
    %v821 = vpack.c.b16 %v585, %v581
    %v822 = vpack.c.b16 %v590, %v586
    %v823 = vpack.c.b16 %v591, %v587
    %v824 = vpack.c.b16 %v592, %v588
    %v825 = vpack.c.b16 %v593, %v589
    %v826 = vpack.c.b16 %v598, %v594
    %v827 = vpack.c.b16 %v599, %v595
    %v828 = vpack.c.b16 %v600, %v596
    %v829 = vpack.c.b16 %v601, %v597
    %v830 = vpack.c.b16 %v606, %v602
    %v831 = vpack.c.b16 %v607, %v603
    %v832 = vpack.c.b16 %v608, %v604
    %v833 = vpack.c.b16 %v609, %v605
    %v834 = vpack.c.b16 %v614, %v610
    %v835 = vpack.c.b16 %v615, %v611
    %v836 = vpack.c.b16 %v616, %v612
    %v837 = vpack.c.b16 %v617, %v613
    %v838 = vpack.c.b16 %v622, %v618
    %v839 = vpack.c.b16 %v623, %v619
    %v840 = vpack.c.b16 %v624, %v620
    %v841 = vpack.c.b16 %v625, %v621
    %v842 = vpack.c.b16 %v630, %v626
    %v843 = vpack.c.b16 %v631, %v627
    %v844 = vpack.c.b16 %v632, %v628
    %v845 = vpack.c.b16 %v633, %v629
    %v846 = vpack.c.b16 %v638, %v634
    %v847 = vpack.c.b16 %v639, %v635
    %v848 = vpack.c.b16 %v640, %v636
    %v849 = vpack.c.b16 %v641, %v637
    %v850 = vpack.c.b16 %v646, %v642
    %v851 = vpack.c.b16 %v647, %v643
    %v852 = vpack.c.b16 %v648, %v644
    %v853 = vpack.c.b16 %v649, %v645
    %v854 = vpack.c.b16 %v654, %v650
    %v855 = vpack.c.b16 %v655, %v651
    %v856 = vpack.c.b16 %v656, %v652
    %v857 = vpack.c.b16 %v657, %v653
    %v858 = vpack.c.b16 %v662, %v658
    %v859 = vpack.c.b16 %v663, %v659
    %v860 = vpack.c.b16 %v664, %v660
    %v861 = vpack.c.b16 %v665, %v661
    %v862 = vpack.c.b16 %v670, %v666
    %v863 = vpack.c.b16 %v671, %v667
    %v864 = vpack.c.b16 %v672, %v668
    %v865 = vpack.c.b16 %v673, %v669
    %v866 = vpack.c.b16 %v678, %v674
    %v867 = vpack.c.b16 %v679, %v675
    %v868 = vpack.c.b16 %v680, %v676
    %v869 = vpack.c.b16 %v681, %v677
    %v870 = vpack.c.b16 %v686, %v682
    %v871 = vpack.c.b16 %v687, %v683
    %v872 = vpack.c.b16 %v688, %v684
    %v873 = vpack.c.b16 %v689, %v685
    %v874 = vpack.c.b16 %v694, %v690
    %v875 = vpack.c.b16 %v695, %v691
    %v876 = vpack.c.b16 %v696, %v692
    %v877 = vpack.c.b16 %v697, %v693
    %v878 = vpack.c.b16 %v702, %v698
    %v879 = vpack.c.b16 %v703, %v699
    %v880 = vpack.c.b16 %v704, %v700
    %v881 = vpack.c.b16 %v705, %v701
    %v882 = vpack.c.b16 %v710, %v706
    %v883 = vpack.c.b16 %v711, %v707
    %v884 = vpack.c.b16 %v712, %v708
    %v885 = vpack.c.b16 %v713, %v709
    %v886 = vpack.c.b16 %v718, %v714
    %v887 = vpack.c.b16 %v719, %v715
    %v888 = vpack.c.b16 %v720, %v716
    %v889 = vpack.c.b16 %v721, %v717
    %v890 = vpack.c.b16 %v726, %v722
    %v891 = vpack.c.b16 %v727, %v723
    %v892 = vpack.c.b16 %v728, %v724
    %v893 = vpack.c.b16 %v729, %v725
    %v894 = vpack.c.b16 %v734, %v730
    %v895 = vpack.c.b16 %v735, %v731
    %v896 = vpack.c.b16 %v736, %v732
    %v897 = vpack.c.b16 %v737, %v733
    %v898 = vpack.c.b16 %v742, %v738
    %v899 = vpack.c.b16 %v743, %v739
    %v900 = vpack.c.b16 %v744, %v740
    %v901 = vpack.c.b16 %v745, %v741
    %v902 = vpack.c.b16 %v750, %v746
    %v903 = vpack.c.b16 %v751, %v747
    %v904 = vpack.c.b16 %v752, %v748
    %v905 = vpack.c.b16 %v753, %v749
    %v906 = vpack.c.b16 %v758, %v754
    %v907 = vpack.c.b16 %v759, %v755
    %v908 = vpack.c.b16 %v760, %v756
    %v909 = vpack.c.b16 %v761, %v757
    %v910 = vpack.c.b16 %v766, %v762
    %v911 = vpack.c.b16 %v767, %v763
    %v912 = vpack.c.b16 %v768, %v764
    %v913 = vpack.c.b16 %v769, %v765
    %v914 = vpack.c.b16 %v774, %v770
    %v915 = vpack.c.b16 %v775, %v771
    %v916 = vpack.c.b16 %v776, %v772
    %v917 = vpack.c.b16 %v777, %v773
    %v918 = vpack.c.b16 %v782, %v778
    %v919 = vpack.c.b16 %v783, %v779
    %v920 = vpack.c.b16 %v784, %v780
    %v921 = vpack.c.b16 %v785, %v781
    %v922 = vpack.c.b16 %v790, %v786
    %v923 = vpack.c.b16 %v791, %v787
    %v924 = vpack.c.b16 %v792, %v788
    %v925 = vpack.c.b16 %v793, %v789
    %v926 = vpack.c.b16 %v798, %v794
    %v927 = vpack.c.b16 %v799, %v795
    %v928 = vpack.c.b16 %v800, %v796
    %v929 = vpack.c.b16 %v801, %v797
    %1058 = vmatprep.subr.bf16.mxu0 %v803
    %1059 = vmatpush1.bf16.msra.mxu0 %v802
    %1060 = vmatprep.subr.bf16.mxu0 %v807
    %1061 = vmatpush1.bf16.msra.mxu0 %v806
    %1062 = vmatprep.subr.bf16.mxu0 %v811
    %1063 = vmatpush1.bf16.msra.mxu0 %v810
    %1064 = vmatprep.subr.bf16.mxu0 %v815
    %1065 = vmatpush1.bf16.msra.mxu0 %v814
    %1066 = vmatprep.subr.bf16.mxu0 %v819
    %1067 = vmatpush1.bf16.msra.mxu0 %v818
    %1068 = vmatprep.subr.bf16.mxu0 %v823
    %1069 = vmatpush1.bf16.msra.mxu0 %v822
    %1070 = vmatprep.subr.bf16.mxu0 %v827
    %1071 = vmatpush1.bf16.msra.mxu0 %v826
    %1072 = vmatprep.subr.bf16.mxu0 %v831
    %1073 = vmatpush1.bf16.msra.mxu0 %v830
    %1074 = vmatprep.subr.bf16.mxu0 %v835
    %1075 = vmatpush1.bf16.msra.mxu0 %v834
    %1076 = vmatprep.subr.bf16.mxu0 %v839
    %1077 = vmatpush1.bf16.msra.mxu0 %v838
    %1078 = vmatprep.subr.bf16.mxu0 %v843
    %1079 = vmatpush1.bf16.msra.mxu0 %v842
    %1080 = vmatprep.subr.bf16.mxu0 %v847
    %1081 = vmatpush1.bf16.msra.mxu0 %v846
    %1082 = vmatprep.subr.bf16.mxu0 %v851
    %1083 = vmatpush1.bf16.msra.mxu0 %v850
    %1084 = vmatprep.subr.bf16.mxu0 %v855
    %1085 = vmatpush1.bf16.msra.mxu0 %v854
    %1086 = vmatprep.subr.bf16.mxu0 %v859
    %1087 = vmatpush1.bf16.msra.mxu0 %v858
    %1088 = vmatprep.subr.bf16.mxu0 %v863
    %1089 = vmatpush1.bf16.msra.mxu0 %v862
    %1090 = vmatprep.mubr.bf16.mxu0 %v287
    %1091 = vmatmul.mubr.bf16.gmra.mrb[0].mxu0 %v286
    %v1092 = vpop.f32.mrb[0].mxu0
    %v1093 = vadd.f32 0.0, %v1092
    %v1094 = vpop.f32.mrb[0].mxu0
    %v1095 = vadd.f32 0.0, %v1094
    %v1096 = vpop.f32.mrb[0].mxu0
    %v1097 = vpop.f32.mrb[0].mxu0
    %1098 = vdwg.mxu0
    %1099 = vmatprep.subr.bf16.mxu0 %v867
    %1100 = vmatpush1.bf16.msra.mxu0 %v866
    %1101 = vmatprep.subr.bf16.mxu0 %v871
    %1102 = vmatpush1.bf16.msra.mxu0 %v870
    %1103 = vmatprep.subr.bf16.mxu0 %v875
    %1104 = vmatpush1.bf16.msra.mxu0 %v874
    %1105 = vmatprep.subr.bf16.mxu0 %v879
    %1106 = vmatpush1.bf16.msra.mxu0 %v878
    %1107 = vmatprep.subr.bf16.mxu0 %v883
    %1108 = vmatpush1.bf16.msra.mxu0 %v882
    %1109 = vmatprep.subr.bf16.mxu0 %v887
    %1110 = vmatpush1.bf16.msra.mxu0 %v886
    %1111 = vmatprep.subr.bf16.mxu0 %v891
    %1112 = vmatpush1.bf16.msra.mxu0 %v890
    %1113 = vmatprep.subr.bf16.mxu0 %v895
    %1114 = vmatpush1.bf16.msra.mxu0 %v894
    %1115 = vmatprep.subr.bf16.mxu0 %v899
    %1116 = vmatpush1.bf16.msra.mxu0 %v898
    %1117 = vmatprep.subr.bf16.mxu0 %v903
    %1118 = vmatpush1.bf16.msra.mxu0 %v902
    %1119 = vmatprep.subr.bf16.mxu0 %v907
    %1120 = vmatpush1.bf16.msra.mxu0 %v906
    %1121 = vmatprep.subr.bf16.mxu0 %v911
    %1122 = vmatpush1.bf16.msra.mxu0 %v910
    %1123 = vmatprep.subr.bf16.mxu0 %v915
    %1124 = vmatpush1.bf16.msra.mxu0 %v914
    %1125 = vmatprep.subr.bf16.mxu0 %v919
    %1126 = vmatpush1.bf16.msra.mxu0 %v918
    %1127 = vmatprep.subr.bf16.mxu0 %v923
    %1128 = vmatpush1.bf16.msra.mxu0 %v922
    %1129 = vmatprep.subr.bf16.mxu0 %v927
    %1130 = vmatpush1.bf16.msra.mxu0 %v926
    %1131 = vmatprep.mubr.bf16.mxu0 %v289
    %1132 = vmatmul.mubr.bf16.gmra.mrb[0].mxu0 %v288
    %v1133 = vpop.f32.mrb[0].mxu0
    %v1134 = vadd.f32 %v1093, %v1133
    %v1135 = vpop.f32.mrb[0].mxu0
    %v1136 = vadd.f32 %v1095, %v1135
    %v1137 = vpop.f32.mrb[0].mxu0
    %v1138 = vpop.f32.mrb[0].mxu0
    %1139 = vdwg.mxu0
    %1140 = vmatprep.subr.bf16.mxu0 %v805
    %1141 = vmatpush1.bf16.msra.mxu0 %v804
    %1142 = vmatprep.subr.bf16.mxu0 %v809
    %1143 = vmatpush1.bf16.msra.mxu0 %v808
    %1144 = vmatprep.subr.bf16.mxu0 %v813
    %1145 = vmatpush1.bf16.msra.mxu0 %v812
    %1146 = vmatprep.subr.bf16.mxu0 %v817
    %1147 = vmatpush1.bf16.msra.mxu0 %v816
    %1148 = vmatprep.subr.bf16.mxu0 %v821
    %1149 = vmatpush1.bf16.msra.mxu0 %v820
    %1150 = vmatprep.subr.bf16.mxu0 %v825
    %1151 = vmatpush1.bf16.msra.mxu0 %v824
    %1152 = vmatprep.subr.bf16.mxu0 %v829
    %1153 = vmatpush1.bf16.msra.mxu0 %v828
    %1154 = vmatprep.subr.bf16.mxu0 %v833
    %1155 = vmatpush1.bf16.msra.mxu0 %v832
    %1156 = vmatprep.subr.bf16.mxu0 %v837
    %1157 = vmatpush1.bf16.msra.mxu0 %v836
    %1158 = vmatprep.subr.bf16.mxu0 %v841
    %1159 = vmatpush1.bf16.msra.mxu0 %v840
    %1160 = vmatprep.subr.bf16.mxu0 %v845
    %1161 = vmatpush1.bf16.msra.mxu0 %v844
    %1162 = vmatprep.subr.bf16.mxu0 %v849
    %1163 = vmatpush1.bf16.msra.mxu0 %v848
    %1164 = vmatprep.subr.bf16.mxu0 %v853
    %1165 = vmatpush1.bf16.msra.mxu0 %v852
    %1166 = vmatprep.subr.bf16.mxu0 %v857
    %1167 = vmatpush1.bf16.msra.mxu0 %v856
    %1168 = vmatprep.subr.bf16.mxu0 %v861
    %1169 = vmatpush1.bf16.msra.mxu0 %v860
    %1170 = vmatprep.subr.bf16.mxu0 %v865
    %1171 = vmatpush1.bf16.msra.mxu0 %v864
    %1172 = vmatprep.mubr.bf16.mxu0 %v287
    %1173 = vmatmul.mubr.bf16.gmra.mrb[0].mxu0 %v286
    %v1174 = vpop.f32.mrb[0].mxu0
    %v1175 = vadd.f32 0.0, %v1174
    %v1176 = vpop.f32.mrb[0].mxu0
    %v1177 = vadd.f32 0.0, %v1176
    %v1178 = vpop.f32.mrb[0].mxu0
    %v1179 = vpop.f32.mrb[0].mxu0
    %1180 = vdwg.mxu0
    %1181 = vmatprep.subr.bf16.mxu0 %v869
    %1182 = vmatpush1.bf16.msra.mxu0 %v868
    %1183 = vmatprep.subr.bf16.mxu0 %v873
    %1184 = vmatpush1.bf16.msra.mxu0 %v872
    %1185 = vmatprep.subr.bf16.mxu0 %v877
    %1186 = vmatpush1.bf16.msra.mxu0 %v876
    %1187 = vmatprep.subr.bf16.mxu0 %v881
    %1188 = vmatpush1.bf16.msra.mxu0 %v880
    %1189 = vmatprep.subr.bf16.mxu0 %v885
    %1190 = vmatpush1.bf16.msra.mxu0 %v884
    %1191 = vmatprep.subr.bf16.mxu0 %v889
    %1192 = vmatpush1.bf16.msra.mxu0 %v888
    %1193 = vmatprep.subr.bf16.mxu0 %v893
    %1194 = vmatpush1.bf16.msra.mxu0 %v892
    %1195 = vmatprep.subr.bf16.mxu0 %v897
    %1196 = vmatpush1.bf16.msra.mxu0 %v896
    %1197 = vmatprep.subr.bf16.mxu0 %v901
    %1198 = vmatpush1.bf16.msra.mxu0 %v900
    %1199 = vmatprep.subr.bf16.mxu0 %v905
    %1200 = vmatpush1.bf16.msra.mxu0 %v904
    %1201 = vmatprep.subr.bf16.mxu0 %v909
    %1202 = vmatpush1.bf16.msra.mxu0 %v908
    %1203 = vmatprep.subr.bf16.mxu0 %v913
    %1204 = vmatpush1.bf16.msra.mxu0 %v912
    %1205 = vmatprep.subr.bf16.mxu0 %v917
    %1206 = vmatpush1.bf16.msra.mxu0 %v916
    %1207 = vmatprep.subr.bf16.mxu0 %v921
    %1208 = vmatpush1.bf16.msra.mxu0 %v920
    %1209 = vmatprep.subr.bf16.mxu0 %v925
    %1210 = vmatpush1.bf16.msra.mxu0 %v924
    %1211 = vmatprep.subr.bf16.mxu0 %v929
    %1212 = vmatpush1.bf16.msra.mxu0 %v928
    %1213 = vmatprep.mubr.bf16.mxu0 %v289
    %1214 = vmatmul.mubr.bf16.gmra.mrb[0].mxu0 %v288
    %v1215 = vpop.f32.mrb[0].mxu0
    %v1216 = vadd.f32 %v1175, %v1215
    %v1217 = vpop.f32.mrb[0].mxu0
    %v1218 = vadd.f32 %v1177, %v1217
    %v1219 = vpop.f32.mrb[0].mxu0
    %v1220 = vpop.f32.mrb[0].mxu0
    %1221 = vdwg.mxu0
    %v1222 = vpack.c.bf16 %v1134, %v1134
    %v1223 = vpack.c.bf16 %v1136, %v1136
    %v1224 = vpack.c.bf16 %v1216, %v1216
    %v1225 = vpack.c.bf16 %v1218, %v1218
    %v1226 = vshrl.u32 %v240, 16
    %v1227 = vpack.i.b16 %v1226, %v1226
    %v1229 = vlaneseq
    %v1230 = vshrl.u32 %v1229, 7
    %v1231 = vsub.s32 0, %v1230
    %v1232 = vrot.slane %v1227, %v1231
    %v1233 = vshrl.u32 %v248, 16
    %v1234 = vpack.i.b16 %v1233, %v1233
    %v1236 = vlaneseq
    %v1237 = vshrl.u32 %v1236, 7
    %v1238 = vsub.s32 0, %v1237
    %v1239 = vrot.slane %v1234, %v1238
    %v1240 = vshrl.u32 %v247, 16
    %v1241 = vpack.i.b16 %v1240, %v1240
    %v1243 = vlaneseq
    %v1244 = vshrl.u32 %v1243, 7
    %v1245 = vsub.s32 0, %v1244
    %v1246 = vrot.slane %v1241, %v1245
    %v1247 = vshrl.u32 %v249, 16
    %v1248 = vpack.i.b16 %v1247, %v1247
    %v1250 = vlaneseq
    %v1251 = vshrl.u32 %v1250, 7
    %v1252 = vsub.s32 0, %v1251
    %v1253 = vrot.slane %v1248, %v1252
    %v1254 = vadd.bf16 %v1222, %v1232
    %v1255 = vadd.bf16 %v1223, %v1239
    %v1256 = vadd.bf16 %v1224, %v1246
    %v1257 = vadd.bf16 %v1225, %v1253
    %v1258 = vmul.bf16 %v1254, 1009007652
    %v1259 = vmul.bf16 %v1255, 1009007652
    %v1260 = vmul.bf16 %v1256, 1009007652
    %v1261 = vmul.bf16 %v1257, 1009007652
    %v1262 = vmax.bf16 %v1254, %v1258
    %v1263 = vmax.bf16 %v1255, %v1259
    %v1264 = vmax.bf16 %v1256, %v1260
    %v1265 = vmax.bf16 %v1257, %v1261
    %v1266 = vld [vmem:[#allocation8] sm:$0xff]
    %v1267 = vld [vmem:[#allocation8 + $0x8] sm:$0xff]
    %v1268 = vld [vmem:[#allocation8 + $0x10] sm:$0xff]
    %v1269 = vld [vmem:[#allocation8 + $0x18] sm:$0xff]
    %v1270 = vld [vmem:[#allocation8 + $0x20] sm:$0xff]
    %v1271 = vld [vmem:[#allocation8 + $0x28] sm:$0xff]
    %v1272 = vld [vmem:[#allocation8 + $0x30] sm:$0xff]
    %v1273 = vld [vmem:[#allocation8 + $0x38] sm:$0xff]
    %v1274 = vld [vmem:[#allocation8 + $0x40] sm:$0xff]
    %v1275 = vld [vmem:[#allocation8 + $0x48] sm:$0xff]
    %v1276 = vld [vmem:[#allocation8 + $0x50] sm:$0xff]
    %v1277 = vld [vmem:[#allocation8 + $0x58] sm:$0xff]
    %v1278 = vld [vmem:[#allocation8 + $0x60] sm:$0xff]
    %v1279 = vld [vmem:[#allocation8 + $0x68] sm:$0xff]
    %v1280 = vld [vmem:[#allocation8 + $0x70] sm:$0xff]
    %v1281 = vld [vmem:[#allocation8 + $0x78] sm:$0xff]
    %v1282 = vld [vmem:[#allocation8 + $0x80] sm:$0xff]
    %v1283 = vld [vmem:[#allocation8 + $0x88] sm:$0xff]
    %v1284 = vld [vmem:[#allocation8 + $0x90] sm:$0xff]
    %v1285 = vld [vmem:[#allocation8 + $0x98] sm:$0xff]
    %v1286 = vld [vmem:[#allocation8 + $0xa0] sm:$0xff]
    %v1287 = vld [vmem:[#allocation8 + $0xa8] sm:$0xff]
    %v1288 = vld [vmem:[#allocation8 + $0xb0] sm:$0xff]
    %v1289 = vld [vmem:[#allocation8 + $0xb8] sm:$0xff]
    %v1290 = vld [vmem:[#allocation8 + $0xc0] sm:$0xff]
    %v1291 = vld [vmem:[#allocation8 + $0xc8] sm:$0xff]
    %v1292 = vld [vmem:[#allocation8 + $0xd0] sm:$0xff]
    %v1293 = vld [vmem:[#allocation8 + $0xd8] sm:$0xff]
    %v1294 = vld [vmem:[#allocation8 + $0xe0] sm:$0xff]
    %v1295 = vld [vmem:[#allocation8 + $0xe8] sm:$0xff]
    %v1296 = vld [vmem:[#allocation8 + $0xf0] sm:$0xff]
    %v1297 = vld [vmem:[#allocation8 + $0xf8] sm:$0xff]
    %v1298 = vld [vmem:[#allocation8 + $0x100] sm:$0xff]
    %v1299 = vld [vmem:[#allocation8 + $0x108] sm:$0xff]
    %v1300 = vld [vmem:[#allocation8 + $0x110] sm:$0xff]
    %v1301 = vld [vmem:[#allocation8 + $0x118] sm:$0xff]
    %v1302 = vld [vmem:[#allocation8 + $0x120] sm:$0xff]
    %v1303 = vld [vmem:[#allocation8 + $0x128] sm:$0xff]
    %v1304 = vld [vmem:[#allocation8 + $0x130] sm:$0xff]
    %v1305 = vld [vmem:[#allocation8 + $0x138] sm:$0xff]
    %v1306 = vld [vmem:[#allocation8 + $0x140] sm:$0xff]
    %v1307 = vld [vmem:[#allocation8 + $0x148] sm:$0xff]
    %v1308 = vld [vmem:[#allocation8 + $0x150] sm:$0xff]
    %v1309 = vld [vmem:[#allocation8 + $0x158] sm:$0xff]
    %v1310 = vld [vmem:[#allocation8 + $0x160] sm:$0xff]
    %v1311 = vld [vmem:[#allocation8 + $0x168] sm:$0xff]
    %v1312 = vld [vmem:[#allocation8 + $0x170] sm:$0xff]
    %v1313 = vld [vmem:[#allocation8 + $0x178] sm:$0xff]
    %v1314 = vld [vmem:[#allocation8 + $0x180] sm:$0xff]
    %v1315 = vld [vmem:[#allocation8 + $0x188] sm:$0xff]
    %v1316 = vld [vmem:[#allocation8 + $0x190] sm:$0xff]
    %v1317 = vld [vmem:[#allocation8 + $0x198] sm:$0xff]
    %v1318 = vld [vmem:[#allocation8 + $0x1a0] sm:$0xff]
    %v1319 = vld [vmem:[#allocation8 + $0x1a8] sm:$0xff]
    %v1320 = vld [vmem:[#allocation8 + $0x1b0] sm:$0xff]
    %v1321 = vld [vmem:[#allocation8 + $0x1b8] sm:$0xff]
    %v1322 = vld [vmem:[#allocation8 + $0x1c0] sm:$0xff]
    %v1323 = vld [vmem:[#allocation8 + $0x1c8] sm:$0xff]
    %v1324 = vld [vmem:[#allocation8 + $0x1d0] sm:$0xff]
    %v1325 = vld [vmem:[#allocation8 + $0x1d8] sm:$0xff]
    %v1326 = vld [vmem:[#allocation8 + $0x1e0] sm:$0xff]
    %v1327 = vld [vmem:[#allocation8 + $0x1e8] sm:$0xff]
    %v1328 = vld [vmem:[#allocation8 + $0x1f0] sm:$0xff]
    %v1329 = vld [vmem:[#allocation8 + $0x1f8] sm:$0xff]
    %v1330 = vld [vmem:[#allocation8 + $0x200] sm:$0xff]
    %v1331 = vld [vmem:[#allocation8 + $0x208] sm:$0xff]
    %v1332 = vld [vmem:[#allocation8 + $0x210] sm:$0xff]
    %v1333 = vld [vmem:[#allocation8 + $0x218] sm:$0xff]
    %v1334 = vld [vmem:[#allocation8 + $0x220] sm:$0xff]
    %v1335 = vld [vmem:[#allocation8 + $0x228] sm:$0xff]
    %v1336 = vld [vmem:[#allocation8 + $0x230] sm:$0xff]
    %v1337 = vld [vmem:[#allocation8 + $0x238] sm:$0xff]
    %v1338 = vld [vmem:[#allocation8 + $0x240] sm:$0xff]
    %v1339 = vld [vmem:[#allocation8 + $0x248] sm:$0xff]
    %v1340 = vld [vmem:[#allocation8 + $0x250] sm:$0xff]
    %v1341 = vld [vmem:[#allocation8 + $0x258] sm:$0xff]
    %v1342 = vld [vmem:[#allocation8 + $0x260] sm:$0xff]
    %v1343 = vld [vmem:[#allocation8 + $0x268] sm:$0xff]
    %v1344 = vld [vmem:[#allocation8 + $0x270] sm:$0xff]
    %v1345 = vld [vmem:[#allocation8 + $0x278] sm:$0xff]
    %v1346 = vld [vmem:[#allocation8 + $0x280] sm:$0xff]
    %v1347 = vld [vmem:[#allocation8 + $0x288] sm:$0xff]
    %v1348 = vld [vmem:[#allocation8 + $0x290] sm:$0xff]
    %v1349 = vld [vmem:[#allocation8 + $0x298] sm:$0xff]
    %v1350 = vld [vmem:[#allocation8 + $0x2a0] sm:$0xff]
    %v1351 = vld [vmem:[#allocation8 + $0x2a8] sm:$0xff]
    %v1352 = vld [vmem:[#allocation8 + $0x2b0] sm:$0xff]
    %v1353 = vld [vmem:[#allocation8 + $0x2b8] sm:$0xff]
    %v1354 = vld [vmem:[#allocation8 + $0x2c0] sm:$0xff]
    %v1355 = vld [vmem:[#allocation8 + $0x2c8] sm:$0xff]
    %v1356 = vld [vmem:[#allocation8 + $0x2d0] sm:$0xff]
    %v1357 = vld [vmem:[#allocation8 + $0x2d8] sm:$0xff]
    %v1358 = vld [vmem:[#allocation8 + $0x2e0] sm:$0xff]
    %v1359 = vld [vmem:[#allocation8 + $0x2e8] sm:$0xff]
    %v1360 = vld [vmem:[#allocation8 + $0x2f0] sm:$0xff]
    %v1361 = vld [vmem:[#allocation8 + $0x2f8] sm:$0xff]
    %v1362 = vld [vmem:[#allocation8 + $0x300] sm:$0xff]
    %v1363 = vld [vmem:[#allocation8 + $0x308] sm:$0xff]
    %v1364 = vld [vmem:[#allocation8 + $0x310] sm:$0xff]
    %v1365 = vld [vmem:[#allocation8 + $0x318] sm:$0xff]
    %v1366 = vld [vmem:[#allocation8 + $0x320] sm:$0xff]
    %v1367 = vld [vmem:[#allocation8 + $0x328] sm:$0xff]
    %v1368 = vld [vmem:[#allocation8 + $0x330] sm:$0xff]
    %v1369 = vld [vmem:[#allocation8 + $0x338] sm:$0xff]
    %v1370 = vld [vmem:[#allocation8 + $0x340] sm:$0xff]
    %v1371 = vld [vmem:[#allocation8 + $0x348] sm:$0xff]
    %v1372 = vld [vmem:[#allocation8 + $0x350] sm:$0xff]
    %v1373 = vld [vmem:[#allocation8 + $0x358] sm:$0xff]
    %v1374 = vld [vmem:[#allocation8 + $0x360] sm:$0xff]
    %v1375 = vld [vmem:[#allocation8 + $0x368] sm:$0xff]
    %v1376 = vld [vmem:[#allocation8 + $0x370] sm:$0xff]
    %v1377 = vld [vmem:[#allocation8 + $0x378] sm:$0xff]
    %v1378 = vld [vmem:[#allocation8 + $0x380] sm:$0xff]
    %v1379 = vld [vmem:[#allocation8 + $0x388] sm:$0xff]
    %v1380 = vld [vmem:[#allocation8 + $0x390] sm:$0xff]
    %v1381 = vld [vmem:[#allocation8 + $0x398] sm:$0xff]
    %v1382 = vld [vmem:[#allocation8 + $0x3a0] sm:$0xff]
    %v1383 = vld [vmem:[#allocation8 + $0x3a8] sm:$0xff]
    %v1384 = vld [vmem:[#allocation8 + $0x3b0] sm:$0xff]
    %v1385 = vld [vmem:[#allocation8 + $0x3b8] sm:$0xff]
    %v1386 = vld [vmem:[#allocation8 + $0x3c0] sm:$0xff]
    %v1387 = vld [vmem:[#allocation8 + $0x3c8] sm:$0xff]
    %v1388 = vld [vmem:[#allocation8 + $0x3d0] sm:$0xff]
    %v1389 = vld [vmem:[#allocation8 + $0x3d8] sm:$0xff]
    %v1390 = vld [vmem:[#allocation8 + $0x3e0] sm:$0xff]
    %v1391 = vld [vmem:[#allocation8 + $0x3e8] sm:$0xff]
    %v1392 = vld [vmem:[#allocation8 + $0x3f0] sm:$0xff]
    %v1393 = vld [vmem:[#allocation8 + $0x3f8] sm:$0xff]
    %v1522 = vunpack.c.l.b16 %v1266
    %v1523 = vunpack.c.h.b16 %v1266
    %v1524 = vunpack.c.l.b16 %v1267
    %v1525 = vunpack.c.h.b16 %v1267
    %v1526 = vunpack.c.l.b16 %v1268
    %v1527 = vunpack.c.h.b16 %v1268
    %v1528 = vunpack.c.l.b16 %v1269
    %v1529 = vunpack.c.h.b16 %v1269
    %v1530 = vunpack.c.l.b16 %v1270
    %v1531 = vunpack.c.h.b16 %v1270
    %v1532 = vunpack.c.l.b16 %v1271
    %v1533 = vunpack.c.h.b16 %v1271
    %v1534 = vunpack.c.l.b16 %v1272
    %v1535 = vunpack.c.h.b16 %v1272
    %v1536 = vunpack.c.l.b16 %v1273
    %v1537 = vunpack.c.h.b16 %v1273
    %v1538 = vunpack.c.l.b16 %v1274
    %v1539 = vunpack.c.h.b16 %v1274
    %v1540 = vunpack.c.l.b16 %v1275
    %v1541 = vunpack.c.h.b16 %v1275
    %v1542 = vunpack.c.l.b16 %v1276
    %v1543 = vunpack.c.h.b16 %v1276
    %v1544 = vunpack.c.l.b16 %v1277
    %v1545 = vunpack.c.h.b16 %v1277
    %v1546 = vunpack.c.l.b16 %v1278
    %v1547 = vunpack.c.h.b16 %v1278
    %v1548 = vunpack.c.l.b16 %v1279
    %v1549 = vunpack.c.h.b16 %v1279
    %v1550 = vunpack.c.l.b16 %v1280
    %v1551 = vunpack.c.h.b16 %v1280
    %v1552 = vunpack.c.l.b16 %v1281
    %v1553 = vunpack.c.h.b16 %v1281
    %v1554 = vunpack.c.l.b16 %v1282
    %v1555 = vunpack.c.h.b16 %v1282
    %v1556 = vunpack.c.l.b16 %v1283
    %v1557 = vunpack.c.h.b16 %v1283
    %v1558 = vunpack.c.l.b16 %v1284
    %v1559 = vunpack.c.h.b16 %v1284
    %v1560 = vunpack.c.l.b16 %v1285
    %v1561 = vunpack.c.h.b16 %v1285
    %v1562 = vunpack.c.l.b16 %v1286
    %v1563 = vunpack.c.h.b16 %v1286
    %v1564 = vunpack.c.l.b16 %v1287
    %v1565 = vunpack.c.h.b16 %v1287
    %v1566 = vunpack.c.l.b16 %v1288
    %v1567 = vunpack.c.h.b16 %v1288
    %v1568 = vunpack.c.l.b16 %v1289
    %v1569 = vunpack.c.h.b16 %v1289
    %v1570 = vunpack.c.l.b16 %v1290
    %v1571 = vunpack.c.h.b16 %v1290
    %v1572 = vunpack.c.l.b16 %v1291
    %v1573 = vunpack.c.h.b16 %v1291
    %v1574 = vunpack.c.l.b16 %v1292
    %v1575 = vunpack.c.h.b16 %v1292
    %v1576 = vunpack.c.l.b16 %v1293
    %v1577 = vunpack.c.h.b16 %v1293
    %v1578 = vunpack.c.l.b16 %v1294
    %v1579 = vunpack.c.h.b16 %v1294
    %v1580 = vunpack.c.l.b16 %v1295
    %v1581 = vunpack.c.h.b16 %v1295
    %v1582 = vunpack.c.l.b16 %v1296
    %v1583 = vunpack.c.h.b16 %v1296
    %v1584 = vunpack.c.l.b16 %v1297
    %v1585 = vunpack.c.h.b16 %v1297
    %v1586 = vunpack.c.l.b16 %v1298
    %v1587 = vunpack.c.h.b16 %v1298
    %v1588 = vunpack.c.l.b16 %v1299
    %v1589 = vunpack.c.h.b16 %v1299
    %v1590 = vunpack.c.l.b16 %v1300
    %v1591 = vunpack.c.h.b16 %v1300
    %v1592 = vunpack.c.l.b16 %v1301
    %v1593 = vunpack.c.h.b16 %v1301
    %v1594 = vunpack.c.l.b16 %v1302
    %v1595 = vunpack.c.h.b16 %v1302
    %v1596 = vunpack.c.l.b16 %v1303
    %v1597 = vunpack.c.h.b16 %v1303
    %v1598 = vunpack.c.l.b16 %v1304
    %v1599 = vunpack.c.h.b16 %v1304
    %v1600 = vunpack.c.l.b16 %v1305
    %v1601 = vunpack.c.h.b16 %v1305
    %v1602 = vunpack.c.l.b16 %v1306
    %v1603 = vunpack.c.h.b16 %v1306
    %v1604 = vunpack.c.l.b16 %v1307
    %v1605 = vunpack.c.h.b16 %v1307
    %v1606 = vunpack.c.l.b16 %v1308
    %v1607 = vunpack.c.h.b16 %v1308
    %v1608 = vunpack.c.l.b16 %v1309
    %v1609 = vunpack.c.h.b16 %v1309
    %v1610 = vunpack.c.l.b16 %v1310
    %v1611 = vunpack.c.h.b16 %v1310
    %v1612 = vunpack.c.l.b16 %v1311
    %v1613 = vunpack.c.h.b16 %v1311
    %v1614 = vunpack.c.l.b16 %v1312
    %v1615 = vunpack.c.h.b16 %v1312
    %v1616 = vunpack.c.l.b16 %v1313
    %v1617 = vunpack.c.h.b16 %v1313
    %v1618 = vunpack.c.l.b16 %v1314
    %v1619 = vunpack.c.h.b16 %v1314
    %v1620 = vunpack.c.l.b16 %v1315
    %v1621 = vunpack.c.h.b16 %v1315
    %v1622 = vunpack.c.l.b16 %v1316
    %v1623 = vunpack.c.h.b16 %v1316
    %v1624 = vunpack.c.l.b16 %v1317
    %v1625 = vunpack.c.h.b16 %v1317
    %v1626 = vunpack.c.l.b16 %v1318
    %v1627 = vunpack.c.h.b16 %v1318
    %v1628 = vunpack.c.l.b16 %v1319
    %v1629 = vunpack.c.h.b16 %v1319
    %v1630 = vunpack.c.l.b16 %v1320
    %v1631 = vunpack.c.h.b16 %v1320
    %v1632 = vunpack.c.l.b16 %v1321
    %v1633 = vunpack.c.h.b16 %v1321
    %v1634 = vunpack.c.l.b16 %v1322
    %v1635 = vunpack.c.h.b16 %v1322
    %v1636 = vunpack.c.l.b16 %v1323
    %v1637 = vunpack.c.h.b16 %v1323
    %v1638 = vunpack.c.l.b16 %v1324
    %v1639 = vunpack.c.h.b16 %v1324
    %v1640 = vunpack.c.l.b16 %v1325
    %v1641 = vunpack.c.h.b16 %v1325
    %v1642 = vunpack.c.l.b16 %v1326
    %v1643 = vunpack.c.h.b16 %v1326
    %v1644 = vunpack.c.l.b16 %v1327
    %v1645 = vunpack.c.h.b16 %v1327
    %v1646 = vunpack.c.l.b16 %v1328
    %v1647 = vunpack.c.h.b16 %v1328
    %v1648 = vunpack.c.l.b16 %v1329
    %v1649 = vunpack.c.h.b16 %v1329
    %v1650 = vunpack.c.l.b16 %v1330
    %v1651 = vunpack.c.h.b16 %v1330
    %v1652 = vunpack.c.l.b16 %v1331
    %v1653 = vunpack.c.h.b16 %v1331
    %v1654 = vunpack.c.l.b16 %v1332
    %v1655 = vunpack.c.h.b16 %v1332
    %v1656 = vunpack.c.l.b16 %v1333
    %v1657 = vunpack.c.h.b16 %v1333
    %v1658 = vunpack.c.l.b16 %v1334
    %v1659 = vunpack.c.h.b16 %v1334
    %v1660 = vunpack.c.l.b16 %v1335
    %v1661 = vunpack.c.h.b16 %v1335
    %v1662 = vunpack.c.l.b16 %v1336
    %v1663 = vunpack.c.h.b16 %v1336
    %v1664 = vunpack.c.l.b16 %v1337
    %v1665 = vunpack.c.h.b16 %v1337
    %v1666 = vunpack.c.l.b16 %v1338
    %v1667 = vunpack.c.h.b16 %v1338
    %v1668 = vunpack.c.l.b16 %v1339
    %v1669 = vunpack.c.h.b16 %v1339
    %v1670 = vunpack.c.l.b16 %v1340
    %v1671 = vunpack.c.h.b16 %v1340
    %v1672 = vunpack.c.l.b16 %v1341
    %v1673 = vunpack.c.h.b16 %v1341
    %v1674 = vunpack.c.l.b16 %v1342
    %v1675 = vunpack.c.h.b16 %v1342
    %v1676 = vunpack.c.l.b16 %v1343
    %v1677 = vunpack.c.h.b16 %v1343
    %v1678 = vunpack.c.l.b16 %v1344
    %v1679 = vunpack.c.h.b16 %v1344
    %v1680 = vunpack.c.l.b16 %v1345
    %v1681 = vunpack.c.h.b16 %v1345
    %v1682 = vunpack.c.l.b16 %v1346
    %v1683 = vunpack.c.h.b16 %v1346
    %v1684 = vunpack.c.l.b16 %v1347
    %v1685 = vunpack.c.h.b16 %v1347
    %v1686 = vunpack.c.l.b16 %v1348
    %v1687 = vunpack.c.h.b16 %v1348
    %v1688 = vunpack.c.l.b16 %v1349
    %v1689 = vunpack.c.h.b16 %v1349
    %v1690 = vunpack.c.l.b16 %v1350
    %v1691 = vunpack.c.h.b16 %v1350
    %v1692 = vunpack.c.l.b16 %v1351
    %v1693 = vunpack.c.h.b16 %v1351
    %v1694 = vunpack.c.l.b16 %v1352
    %v1695 = vunpack.c.h.b16 %v1352
    %v1696 = vunpack.c.l.b16 %v1353
    %v1697 = vunpack.c.h.b16 %v1353
    %v1698 = vunpack.c.l.b16 %v1354
    %v1699 = vunpack.c.h.b16 %v1354
    %v1700 = vunpack.c.l.b16 %v1355
    %v1701 = vunpack.c.h.b16 %v1355
    %v1702 = vunpack.c.l.b16 %v1356
    %v1703 = vunpack.c.h.b16 %v1356
    %v1704 = vunpack.c.l.b16 %v1357
    %v1705 = vunpack.c.h.b16 %v1357
    %v1706 = vunpack.c.l.b16 %v1358
    %v1707 = vunpack.c.h.b16 %v1358
    %v1708 = vunpack.c.l.b16 %v1359
    %v1709 = vunpack.c.h.b16 %v1359
    %v1710 = vunpack.c.l.b16 %v1360
    %v1711 = vunpack.c.h.b16 %v1360
    %v1712 = vunpack.c.l.b16 %v1361
    %v1713 = vunpack.c.h.b16 %v1361
    %v1714 = vunpack.c.l.b16 %v1362
    %v1715 = vunpack.c.h.b16 %v1362
    %v1716 = vunpack.c.l.b16 %v1363
    %v1717 = vunpack.c.h.b16 %v1363
    %v1718 = vunpack.c.l.b16 %v1364
    %v1719 = vunpack.c.h.b16 %v1364
    %v1720 = vunpack.c.l.b16 %v1365
    %v1721 = vunpack.c.h.b16 %v1365
    %v1722 = vunpack.c.l.b16 %v1366
    %v1723 = vunpack.c.h.b16 %v1366
    %v1724 = vunpack.c.l.b16 %v1367
    %v1725 = vunpack.c.h.b16 %v1367
    %v1726 = vunpack.c.l.b16 %v1368
    %v1727 = vunpack.c.h.b16 %v1368
    %v1728 = vunpack.c.l.b16 %v1369
    %v1729 = vunpack.c.h.b16 %v1369
    %v1730 = vunpack.c.l.b16 %v1370
    %v1731 = vunpack.c.h.b16 %v1370
    %v1732 = vunpack.c.l.b16 %v1371
    %v1733 = vunpack.c.h.b16 %v1371
    %v1734 = vunpack.c.l.b16 %v1372
    %v1735 = vunpack.c.h.b16 %v1372
    %v1736 = vunpack.c.l.b16 %v1373
    %v1737 = vunpack.c.h.b16 %v1373
    %v1738 = vunpack.c.l.b16 %v1374
    %v1739 = vunpack.c.h.b16 %v1374
    %v1740 = vunpack.c.l.b16 %v1375
    %v1741 = vunpack.c.h.b16 %v1375
    %v1742 = vunpack.c.l.b16 %v1376
    %v1743 = vunpack.c.h.b16 %v1376
    %v1744 = vunpack.c.l.b16 %v1377
    %v1745 = vunpack.c.h.b16 %v1377
    %v1746 = vunpack.c.l.b16 %v1378
    %v1747 = vunpack.c.h.b16 %v1378
    %v1748 = vunpack.c.l.b16 %v1379
    %v1749 = vunpack.c.h.b16 %v1379
    %v1750 = vunpack.c.l.b16 %v1380
    %v1751 = vunpack.c.h.b16 %v1380
    %v1752 = vunpack.c.l.b16 %v1381
    %v1753 = vunpack.c.h.b16 %v1381
    %v1754 = vunpack.c.l.b16 %v1382
    %v1755 = vunpack.c.h.b16 %v1382
    %v1756 = vunpack.c.l.b16 %v1383
    %v1757 = vunpack.c.h.b16 %v1383
    %v1758 = vunpack.c.l.b16 %v1384
    %v1759 = vunpack.c.h.b16 %v1384
    %v1760 = vunpack.c.l.b16 %v1385
    %v1761 = vunpack.c.h.b16 %v1385
    %v1762 = vunpack.c.l.b16 %v1386
    %v1763 = vunpack.c.h.b16 %v1386
    %v1764 = vunpack.c.l.b16 %v1387
    %v1765 = vunpack.c.h.b16 %v1387
    %v1766 = vunpack.c.l.b16 %v1388
    %v1767 = vunpack.c.h.b16 %v1388
    %v1768 = vunpack.c.l.b16 %v1389
    %v1769 = vunpack.c.h.b16 %v1389
    %v1770 = vunpack.c.l.b16 %v1390
    %v1771 = vunpack.c.h.b16 %v1390
    %v1772 = vunpack.c.l.b16 %v1391
    %v1773 = vunpack.c.h.b16 %v1391
    %v1774 = vunpack.c.l.b16 %v1392
    %v1775 = vunpack.c.h.b16 %v1392
    %v1776 = vunpack.c.l.b16 %v1393
    %v1777 = vunpack.c.h.b16 %v1393
    %v1778 = vpack.c.b16 %v1526, %v1522
    %v1779 = vpack.c.b16 %v1527, %v1523
    %v1780 = vpack.c.b16 %v1528, %v1524
    %v1781 = vpack.c.b16 %v1529, %v1525
    %v1782 = vpack.c.b16 %v1534, %v1530
    %v1783 = vpack.c.b16 %v1535, %v1531
    %v1784 = vpack.c.b16 %v1536, %v1532
    %v1785 = vpack.c.b16 %v1537, %v1533
    %v1786 = vpack.c.b16 %v1542, %v1538
    %v1787 = vpack.c.b16 %v1543, %v1539
    %v1788 = vpack.c.b16 %v1544, %v1540
    %v1789 = vpack.c.b16 %v1545, %v1541
    %v1790 = vpack.c.b16 %v1550, %v1546
    %v1791 = vpack.c.b16 %v1551, %v1547
    %v1792 = vpack.c.b16 %v1552, %v1548
    %v1793 = vpack.c.b16 %v1553, %v1549
    %v1794 = vpack.c.b16 %v1558, %v1554
    %v1795 = vpack.c.b16 %v1559, %v1555
    %v1796 = vpack.c.b16 %v1560, %v1556
    %v1797 = vpack.c.b16 %v1561, %v1557
    %v1798 = vpack.c.b16 %v1566, %v1562
    %v1799 = vpack.c.b16 %v1567, %v1563
    %v1800 = vpack.c.b16 %v1568, %v1564
    %v1801 = vpack.c.b16 %v1569, %v1565
    %v1802 = vpack.c.b16 %v1574, %v1570
    %v1803 = vpack.c.b16 %v1575, %v1571
    %v1804 = vpack.c.b16 %v1576, %v1572
    %v1805 = vpack.c.b16 %v1577, %v1573
    %v1806 = vpack.c.b16 %v1582, %v1578
    %v1807 = vpack.c.b16 %v1583, %v1579
    %v1808 = vpack.c.b16 %v1584, %v1580
    %v1809 = vpack.c.b16 %v1585, %v1581
    %v1810 = vpack.c.b16 %v1590, %v1586
    %v1811 = vpack.c.b16 %v1591, %v1587
    %v1812 = vpack.c.b16 %v1592, %v1588
    %v1813 = vpack.c.b16 %v1593, %v1589
    %v1814 = vpack.c.b16 %v1598, %v1594
    %v1815 = vpack.c.b16 %v1599, %v1595
    %v1816 = vpack.c.b16 %v1600, %v1596
    %v1817 = vpack.c.b16 %v1601, %v1597
    %v1818 = vpack.c.b16 %v1606, %v1602
    %v1819 = vpack.c.b16 %v1607, %v1603
    %v1820 = vpack.c.b16 %v1608, %v1604
    %v1821 = vpack.c.b16 %v1609, %v1605
    %v1822 = vpack.c.b16 %v1614, %v1610
    %v1823 = vpack.c.b16 %v1615, %v1611
    %v1824 = vpack.c.b16 %v1616, %v1612
    %v1825 = vpack.c.b16 %v1617, %v1613
    %v1826 = vpack.c.b16 %v1622, %v1618
    %v1827 = vpack.c.b16 %v1623, %v1619
    %v1828 = vpack.c.b16 %v1624, %v1620
    %v1829 = vpack.c.b16 %v1625, %v1621
    %v1830 = vpack.c.b16 %v1630, %v1626
    %v1831 = vpack.c.b16 %v1631, %v1627
    %v1832 = vpack.c.b16 %v1632, %v1628
    %v1833 = vpack.c.b16 %v1633, %v1629
    %v1834 = vpack.c.b16 %v1638, %v1634
    %v1835 = vpack.c.b16 %v1639, %v1635
    %v1836 = vpack.c.b16 %v1640, %v1636
    %v1837 = vpack.c.b16 %v1641, %v1637
    %v1838 = vpack.c.b16 %v1646, %v1642
    %v1839 = vpack.c.b16 %v1647, %v1643
    %v1840 = vpack.c.b16 %v1648, %v1644
    %v1841 = vpack.c.b16 %v1649, %v1645
    %v1842 = vpack.c.b16 %v1654, %v1650
    %v1843 = vpack.c.b16 %v1655, %v1651
    %v1844 = vpack.c.b16 %v1656, %v1652
    %v1845 = vpack.c.b16 %v1657, %v1653
    %v1846 = vpack.c.b16 %v1662, %v1658
    %v1847 = vpack.c.b16 %v1663, %v1659
    %v1848 = vpack.c.b16 %v1664, %v1660
    %v1849 = vpack.c.b16 %v1665, %v1661
    %v1850 = vpack.c.b16 %v1670, %v1666
    %v1851 = vpack.c.b16 %v1671, %v1667
    %v1852 = vpack.c.b16 %v1672, %v1668
    %v1853 = vpack.c.b16 %v1673, %v1669
    %v1854 = vpack.c.b16 %v1678, %v1674
    %v1855 = vpack.c.b16 %v1679, %v1675
    %v1856 = vpack.c.b16 %v1680, %v1676
    %v1857 = vpack.c.b16 %v1681, %v1677
    %v1858 = vpack.c.b16 %v1686, %v1682
    %v1859 = vpack.c.b16 %v1687, %v1683
    %v1860 = vpack.c.b16 %v1688, %v1684
    %v1861 = vpack.c.b16 %v1689, %v1685
    %v1862 = vpack.c.b16 %v1694, %v1690
    %v1863 = vpack.c.b16 %v1695, %v1691
    %v1864 = vpack.c.b16 %v1696, %v1692
    %v1865 = vpack.c.b16 %v1697, %v1693
    %v1866 = vpack.c.b16 %v1702, %v1698
    %v1867 = vpack.c.b16 %v1703, %v1699
    %v1868 = vpack.c.b16 %v1704, %v1700
    %v1869 = vpack.c.b16 %v1705, %v1701
    %v1870 = vpack.c.b16 %v1710, %v1706
    %v1871 = vpack.c.b16 %v1711, %v1707
    %v1872 = vpack.c.b16 %v1712, %v1708
    %v1873 = vpack.c.b16 %v1713, %v1709
    %v1874 = vpack.c.b16 %v1718, %v1714
    %v1875 = vpack.c.b16 %v1719, %v1715
    %v1876 = vpack.c.b16 %v1720, %v1716
    %v1877 = vpack.c.b16 %v1721, %v1717
    %v1878 = vpack.c.b16 %v1726, %v1722
    %v1879 = vpack.c.b16 %v1727, %v1723
    %v1880 = vpack.c.b16 %v1728, %v1724
    %v1881 = vpack.c.b16 %v1729, %v1725
    %v1882 = vpack.c.b16 %v1734, %v1730
    %v1883 = vpack.c.b16 %v1735, %v1731
    %v1884 = vpack.c.b16 %v1736, %v1732
    %v1885 = vpack.c.b16 %v1737, %v1733
    %v1886 = vpack.c.b16 %v1742, %v1738
    %v1887 = vpack.c.b16 %v1743, %v1739
    %v1888 = vpack.c.b16 %v1744, %v1740
    %v1889 = vpack.c.b16 %v1745, %v1741
    %v1890 = vpack.c.b16 %v1750, %v1746
    %v1891 = vpack.c.b16 %v1751, %v1747
    %v1892 = vpack.c.b16 %v1752, %v1748
    %v1893 = vpack.c.b16 %v1753, %v1749
    %v1894 = vpack.c.b16 %v1758, %v1754
    %v1895 = vpack.c.b16 %v1759, %v1755
    %v1896 = vpack.c.b16 %v1760, %v1756
    %v1897 = vpack.c.b16 %v1761, %v1757
    %v1898 = vpack.c.b16 %v1766, %v1762
    %v1899 = vpack.c.b16 %v1767, %v1763
    %v1900 = vpack.c.b16 %v1768, %v1764
    %v1901 = vpack.c.b16 %v1769, %v1765
    %v1902 = vpack.c.b16 %v1774, %v1770
    %v1903 = vpack.c.b16 %v1775, %v1771
    %v1904 = vpack.c.b16 %v1776, %v1772
    %v1905 = vpack.c.b16 %v1777, %v1773
    %2034 = vmatprep.subr.bf16.mxu0 %v1779
    %2035 = vmatpush1.bf16.msra.mxu0 %v1778
    %2036 = vmatprep.subr.bf16.mxu0 %v1783
    %2037 = vmatpush1.bf16.msra.mxu0 %v1782
    %2038 = vmatprep.subr.bf16.mxu0 %v1787
    %2039 = vmatpush1.bf16.msra.mxu0 %v1786
    %2040 = vmatprep.subr.bf16.mxu0 %v1791
    %2041 = vmatpush1.bf16.msra.mxu0 %v1790
    %2042 = vmatprep.subr.bf16.mxu0 %v1795
    %2043 = vmatpush1.bf16.msra.mxu0 %v1794
    %2044 = vmatprep.subr.bf16.mxu0 %v1799
    %2045 = vmatpush1.bf16.msra.mxu0 %v1798
    %2046 = vmatprep.subr.bf16.mxu0 %v1803
    %2047 = vmatpush1.bf16.msra.mxu0 %v1802
    %2048 = vmatprep.subr.bf16.mxu0 %v1807
    %2049 = vmatpush1.bf16.msra.mxu0 %v1806
    %2050 = vmatprep.subr.bf16.mxu0 %v1811
    %2051 = vmatpush1.bf16.msra.mxu0 %v1810
    %2052 = vmatprep.subr.bf16.mxu0 %v1815
    %2053 = vmatpush1.bf16.msra.mxu0 %v1814
    %2054 = vmatprep.subr.bf16.mxu0 %v1819
    %2055 = vmatpush1.bf16.msra.mxu0 %v1818
    %2056 = vmatprep.subr.bf16.mxu0 %v1823
    %2057 = vmatpush1.bf16.msra.mxu0 %v1822
    %2058 = vmatprep.subr.bf16.mxu0 %v1827
    %2059 = vmatpush1.bf16.msra.mxu0 %v1826
    %2060 = vmatprep.subr.bf16.mxu0 %v1831
    %2061 = vmatpush1.bf16.msra.mxu0 %v1830
    %2062 = vmatprep.subr.bf16.mxu0 %v1835
    %2063 = vmatpush1.bf16.msra.mxu0 %v1834
    %2064 = vmatprep.subr.bf16.mxu0 %v1839
    %2065 = vmatpush1.bf16.msra.mxu0 %v1838
    %2066 = vmatprep.mubr.bf16.mxu0 %v1263
    %2067 = vmatmul.mubr.bf16.gmra.mrb[0].mxu0 %v1262
    %v2068 = vpop.f32.mrb[0].mxu0
    %v2069 = vadd.f32 0.0, %v2068
    %v2070 = vpop.f32.mrb[0].mxu0
    %v2071 = vadd.f32 0.0, %v2070
    %v2072 = vpop.f32.mrb[0].mxu0
    %v2073 = vpop.f32.mrb[0].mxu0
    %2074 = vdwg.mxu0
    %2075 = vmatprep.subr.bf16.mxu0 %v1843
    %2076 = vmatpush1.bf16.msra.mxu0 %v1842
    %2077 = vmatprep.subr.bf16.mxu0 %v1847
    %2078 = vmatpush1.bf16.msra.mxu0 %v1846
    %2079 = vmatprep.subr.bf16.mxu0 %v1851
    %2080 = vmatpush1.bf16.msra.mxu0 %v1850
    %2081 = vmatprep.subr.bf16.mxu0 %v1855
    %2082 = vmatpush1.bf16.msra.mxu0 %v1854
    %2083 = vmatprep.subr.bf16.mxu0 %v1859
    %2084 = vmatpush1.bf16.msra.mxu0 %v1858
    %2085 = vmatprep.subr.bf16.mxu0 %v1863
    %2086 = vmatpush1.bf16.msra.mxu0 %v1862
    %2087 = vmatprep.subr.bf16.mxu0 %v1867
    %2088 = vmatpush1.bf16.msra.mxu0 %v1866
    %2089 = vmatprep.subr.bf16.mxu0 %v1871
    %2090 = vmatpush1.bf16.msra.mxu0 %v1870
    %2091 = vmatprep.subr.bf16.mxu0 %v1875
    %2092 = vmatpush1.bf16.msra.mxu0 %v1874
    %2093 = vmatprep.subr.bf16.mxu0 %v1879
    %2094 = vmatpush1.bf16.msra.mxu0 %v1878
    %2095 = vmatprep.subr.bf16.mxu0 %v1883
    %2096 = vmatpush1.bf16.msra.mxu0 %v1882
    %2097 = vmatprep.subr.bf16.mxu0 %v1887
    %2098 = vmatpush1.bf16.msra.mxu0 %v1886
    %2099 = vmatprep.subr.bf16.mxu0 %v1891
    %2100 = vmatpush1.bf16.msra.mxu0 %v1890
    %2101 = vmatprep.subr.bf16.mxu0 %v1895
    %2102 = vmatpush1.bf16.msra.mxu0 %v1894
    %2103 = vmatprep.subr.bf16.mxu0 %v1899
    %2104 = vmatpush1.bf16.msra.mxu0 %v1898
    %2105 = vmatprep.subr.bf16.mxu0 %v1903
    %2106 = vmatpush1.bf16.msra.mxu0 %v1902
    %2107 = vmatprep.mubr.bf16.mxu0 %v1265
    %2108 = vmatmul.mubr.bf16.gmra.mrb[0].mxu0 %v1264
    %v2109 = vpop.f32.mrb[0].mxu0
    %v2110 = vadd.f32 %v2069, %v2109
    %v2111 = vpop.f32.mrb[0].mxu0
    %v2112 = vadd.f32 %v2071, %v2111
    %v2113 = vpop.f32.mrb[0].mxu0
    %v2114 = vpop.f32.mrb[0].mxu0
    %2115 = vdwg.mxu0
    %2116 = vmatprep.subr.bf16.mxu0 %v1781
    %2117 = vmatpush1.bf16.msra.mxu0 %v1780
    %2118 = vmatprep.subr.bf16.mxu0 %v1785
    %2119 = vmatpush1.bf16.msra.mxu0 %v1784
    %2120 = vmatprep.subr.bf16.mxu0 %v1789
    %2121 = vmatpush1.bf16.msra.mxu0 %v1788
    %2122 = vmatprep.subr.bf16.mxu0 %v1793
    %2123 = vmatpush1.bf16.msra.mxu0 %v1792
    %2124 = vmatprep.subr.bf16.mxu0 %v1797
    %2125 = vmatpush1.bf16.msra.mxu0 %v1796
    %2126 = vmatprep.subr.bf16.mxu0 %v1801
    %2127 = vmatpush1.bf16.msra.mxu0 %v1800
    %2128 = vmatprep.subr.bf16.mxu0 %v1805
    %2129 = vmatpush1.bf16.msra.mxu0 %v1804
    %2130 = vmatprep.subr.bf16.mxu0 %v1809
    %2131 = vmatpush1.bf16.msra.mxu0 %v1808
    %2132 = vmatprep.subr.bf16.mxu0 %v1813
    %2133 = vmatpush1.bf16.msra.mxu0 %v1812
    %2134 = vmatprep.subr.bf16.mxu0 %v1817
    %2135 = vmatpush1.bf16.msra.mxu0 %v1816
    %2136 = vmatprep.subr.bf16.mxu0 %v1821
    %2137 = vmatpush1.bf16.msra.mxu0 %v1820
    %2138 = vmatprep.subr.bf16.mxu0 %v1825
    %2139 = vmatpush1.bf16.msra.mxu0 %v1824
    %2140 = vmatprep.subr.bf16.mxu0 %v1829
    %2141 = vmatpush1.bf16.msra.mxu0 %v1828
    %2142 = vmatprep.subr.bf16.mxu0 %v1833
    %2143 = vmatpush1.bf16.msra.mxu0 %v1832
    %2144 = vmatprep.subr.bf16.mxu0 %v1837
    %2145 = vmatpush1.bf16.msra.mxu0 %v1836
    %2146 = vmatprep.subr.bf16.mxu0 %v1841
    %2147 = vmatpush1.bf16.msra.mxu0 %v1840
    %2148 = vmatprep.mubr.bf16.mxu0 %v1263
    %2149 = vmatmul.mubr.bf16.gmra.mrb[0].mxu0 %v1262
    %v2150 = vpop.f32.mrb[0].mxu0
    %v2151 = vadd.f32 0.0, %v2150
    %v2152 = vpop.f32.mrb[0].mxu0
    %v2153 = vadd.f32 0.0, %v2152
    %v2154 = vpop.f32.mrb[0].mxu0
    %v2155 = vpop.f32.mrb[0].mxu0
    %2156 = vdwg.mxu0
    %2157 = vmatprep.subr.bf16.mxu0 %v1845
    %2158 = vmatpush1.bf16.msra.mxu0 %v1844
    %2159 = vmatprep.subr.bf16.mxu0 %v1849
    %2160 = vmatpush1.bf16.msra.mxu0 %v1848
    %2161 = vmatprep.subr.bf16.mxu0 %v1853
    %2162 = vmatpush1.bf16.msra.mxu0 %v1852
    %2163 = vmatprep.subr.bf16.mxu0 %v1857
    %2164 = vmatpush1.bf16.msra.mxu0 %v1856
    %2165 = vmatprep.subr.bf16.mxu0 %v1861
    %2166 = vmatpush1.bf16.msra.mxu0 %v1860
    %2167 = vmatprep.subr.bf16.mxu0 %v1865
    %2168 = vmatpush1.bf16.msra.mxu0 %v1864
    %2169 = vmatprep.subr.bf16.mxu0 %v1869
    %2170 = vmatpush1.bf16.msra.mxu0 %v1868
    %2171 = vmatprep.subr.bf16.mxu0 %v1873
    %2172 = vmatpush1.bf16.msra.mxu0 %v1872
    %2173 = vmatprep.subr.bf16.mxu0 %v1877
    %2174 = vmatpush1.bf16.msra.mxu0 %v1876
    %2175 = vmatprep.subr.bf16.mxu0 %v1881
    %2176 = vmatpush1.bf16.msra.mxu0 %v1880
    %2177 = vmatprep.subr.bf16.mxu0 %v1885
    %2178 = vmatpush1.bf16.msra.mxu0 %v1884
    %2179 = vmatprep.subr.bf16.mxu0 %v1889
    %2180 = vmatpush1.bf16.msra.mxu0 %v1888
    %2181 = vmatprep.subr.bf16.mxu0 %v1893
    %2182 = vmatpush1.bf16.msra.mxu0 %v1892
    %2183 = vmatprep.subr.bf16.mxu0 %v1897
    %2184 = vmatpush1.bf16.msra.mxu0 %v1896
    %2185 = vmatprep.subr.bf16.mxu0 %v1901
    %2186 = vmatpush1.bf16.msra.mxu0 %v1900
    %2187 = vmatprep.subr.bf16.mxu0 %v1905
    %2188 = vmatpush1.bf16.msra.mxu0 %v1904
    %2189 = vmatprep.mubr.bf16.mxu0 %v1265
    %2190 = vmatmul.mubr.bf16.gmra.mrb[0].mxu0 %v1264
    %v2191 = vpop.f32.mrb[0].mxu0
    %v2192 = vadd.f32 %v2151, %v2191
    %v2193 = vpop.f32.mrb[0].mxu0
    %v2194 = vadd.f32 %v2153, %v2193
    %v2195 = vpop.f32.mrb[0].mxu0
    %v2196 = vpop.f32.mrb[0].mxu0
    %2197 = vdwg.mxu0
    %v2198 = vpack.c.bf16 %v2110, %v2110
    %v2199 = vpack.c.bf16 %v2112, %v2112
    %v2200 = vpack.c.bf16 %v2192, %v2192
    %v2201 = vpack.c.bf16 %v2194, %v2194
    %v2202 = vlaneseq
    %v2203 = vshrl.u32 %v2202, 7
    %v2204 = vsub.s32 1, %v2203
    %v2205 = vrot.slane %v251, %v2204
    %v2206 = vlaneseq
    %v2207 = vshrl.u32 %v2206, 7
    %v2208 = vsub.s32 1, %v2207
    %v2209 = vrot.slane %v258, %v2208
    %v2210 = vlaneseq
    %v2211 = vshrl.u32 %v2210, 7
    %v2212 = vsub.s32 1, %v2211
    %v2213 = vrot.slane %v265, %v2212
    %v2214 = vlaneseq
    %v2215 = vshrl.u32 %v2214, 7
    %v2216 = vsub.s32 1, %v2215
    %v2217 = vrot.slane %v272, %v2216
    %v2218 = vadd.bf16 %v2198, %v2205
    %v2219 = vadd.bf16 %v2199, %v2209
    %v2220 = vadd.bf16 %v2200, %v2213
    %v2221 = vadd.bf16 %v2201, %v2217
    %v2222 = vmul.bf16 %v2218, 1009007652
    %v2223 = vmul.bf16 %v2219, 1009007652
    %v2224 = vmul.bf16 %v2220, 1009007652
    %v2225 = vmul.bf16 %v2221, 1009007652
    %v2226 = vmax.bf16 %v2218, %v2222
    %v2227 = vmax.bf16 %v2219, %v2223
    %v2228 = vmax.bf16 %v2220, %v2224
    %v2229 = vmax.bf16 %v2221, %v2225
    %v2230 = vld [vmem:[#allocation10] sm:$0xf]
    %v2231 = vld [vmem:[#allocation10 + $0x4] sm:$0xf]
    %v2232 = vld [vmem:[#allocation10 + $0x8] sm:$0xf]
    %v2233 = vld [vmem:[#allocation10 + $0xc] sm:$0xf]
    %v2234 = vld [vmem:[#allocation10 + $0x10] sm:$0xf]
    %v2235 = vld [vmem:[#allocation10 + $0x14] sm:$0xf]
    %v2236 = vld [vmem:[#allocation10 + $0x18] sm:$0xf]
    %v2237 = vld [vmem:[#allocation10 + $0x1c] sm:$0xf]
    %v2238 = vld [vmem:[#allocation10 + $0x20] sm:$0xf]
    %v2239 = vld [vmem:[#allocation10 + $0x24] sm:$0xf]
    %v2240 = vld [vmem:[#allocation10 + $0x28] sm:$0xf]
    %v2241 = vld [vmem:[#allocation10 + $0x2c] sm:$0xf]
    %v2242 = vld [vmem:[#allocation10 + $0x30] sm:$0xf]
    %v2243 = vld [vmem:[#allocation10 + $0x34] sm:$0xf]
    %v2244 = vld [vmem:[#allocation10 + $0x38] sm:$0xf]
    %v2245 = vld [vmem:[#allocation10 + $0x3c] sm:$0xf]
    %v2246 = vld [vmem:[#allocation10 + $0x40] sm:$0xf]
    %v2247 = vld [vmem:[#allocation10 + $0x44] sm:$0xf]
    %v2248 = vld [vmem:[#allocation10 + $0x48] sm:$0xf]
    %v2249 = vld [vmem:[#allocation10 + $0x4c] sm:$0xf]
    %v2250 = vld [vmem:[#allocation10 + $0x50] sm:$0xf]
    %v2251 = vld [vmem:[#allocation10 + $0x54] sm:$0xf]
    %v2252 = vld [vmem:[#allocation10 + $0x58] sm:$0xf]
    %v2253 = vld [vmem:[#allocation10 + $0x5c] sm:$0xf]
    %v2254 = vld [vmem:[#allocation10 + $0x60] sm:$0xf]
    %v2255 = vld [vmem:[#allocation10 + $0x64] sm:$0xf]
    %v2256 = vld [vmem:[#allocation10 + $0x68] sm:$0xf]
    %v2257 = vld [vmem:[#allocation10 + $0x6c] sm:$0xf]
    %v2258 = vld [vmem:[#allocation10 + $0x70] sm:$0xf]
    %v2259 = vld [vmem:[#allocation10 + $0x74] sm:$0xf]
    %v2260 = vld [vmem:[#allocation10 + $0x78] sm:$0xf]
    %v2261 = vld [vmem:[#allocation10 + $0x7c] sm:$0xf]
    %v2262 = vld [vmem:[#allocation10 + $0x80] sm:$0xf]
    %v2263 = vld [vmem:[#allocation10 + $0x84] sm:$0xf]
    %v2264 = vld [vmem:[#allocation10 + $0x88] sm:$0xf]
    %v2265 = vld [vmem:[#allocation10 + $0x8c] sm:$0xf]
    %v2266 = vld [vmem:[#allocation10 + $0x90] sm:$0xf]
    %v2267 = vld [vmem:[#allocation10 + $0x94] sm:$0xf]
    %v2268 = vld [vmem:[#allocation10 + $0x98] sm:$0xf]
    %v2269 = vld [vmem:[#allocation10 + $0x9c] sm:$0xf]
    %v2270 = vld [vmem:[#allocation10 + $0xa0] sm:$0xf]
    %v2271 = vld [vmem:[#allocation10 + $0xa4] sm:$0xf]
    %v2272 = vld [vmem:[#allocation10 + $0xa8] sm:$0xf]
    %v2273 = vld [vmem:[#allocation10 + $0xac] sm:$0xf]
    %v2274 = vld [vmem:[#allocation10 + $0xb0] sm:$0xf]
    %v2275 = vld [vmem:[#allocation10 + $0xb4] sm:$0xf]
    %v2276 = vld [vmem:[#allocation10 + $0xb8] sm:$0xf]
    %v2277 = vld [vmem:[#allocation10 + $0xbc] sm:$0xf]
    %v2278 = vld [vmem:[#allocation10 + $0xc0] sm:$0xf]
    %v2279 = vld [vmem:[#allocation10 + $0xc4] sm:$0xf]
    %v2280 = vld [vmem:[#allocation10 + $0xc8] sm:$0xf]
    %v2281 = vld [vmem:[#allocation10 + $0xcc] sm:$0xf]
    %v2282 = vld [vmem:[#allocation10 + $0xd0] sm:$0xf]
    %v2283 = vld [vmem:[#allocation10 + $0xd4] sm:$0xf]
    %v2284 = vld [vmem:[#allocation10 + $0xd8] sm:$0xf]
    %v2285 = vld [vmem:[#allocation10 + $0xdc] sm:$0xf]
    %v2286 = vld [vmem:[#allocation10 + $0xe0] sm:$0xf]
    %v2287 = vld [vmem:[#allocation10 + $0xe4] sm:$0xf]
    %v2288 = vld [vmem:[#allocation10 + $0xe8] sm:$0xf]
    %v2289 = vld [vmem:[#allocation10 + $0xec] sm:$0xf]
    %v2290 = vld [vmem:[#allocation10 + $0xf0] sm:$0xf]
    %v2291 = vld [vmem:[#allocation10 + $0xf4] sm:$0xf]
    %v2292 = vld [vmem:[#allocation10 + $0xf8] sm:$0xf]
    %v2293 = vld [vmem:[#allocation10 + $0xfc] sm:$0xf]
    %v2294 = vunpack.c.l.bf16 %v92
    %v2295 = vlaneseq
    %v2296 = vshrl.u32 %v2295, 7
    %v2297 = vsub.s32 3, %v2296
    %v2298 = vrot.slane %v2294, %v2297
    %v2363 = vunpack.c.l.b16 %v2230
    %v2364 = vunpack.c.l.b16 %v2231
    %v2365 = vunpack.c.l.b16 %v2232
    %v2366 = vunpack.c.l.b16 %v2233
    %v2367 = vunpack.c.l.b16 %v2234
    %v2368 = vunpack.c.l.b16 %v2235
    %v2369 = vunpack.c.l.b16 %v2236
    %v2370 = vunpack.c.l.b16 %v2237
    %v2371 = vunpack.c.l.b16 %v2238
    %v2372 = vunpack.c.l.b16 %v2239
    %v2373 = vunpack.c.l.b16 %v2240
    %v2374 = vunpack.c.l.b16 %v2241
    %v2375 = vunpack.c.l.b16 %v2242
    %v2376 = vunpack.c.l.b16 %v2243
    %v2377 = vunpack.c.l.b16 %v2244
    %v2378 = vunpack.c.l.b16 %v2245
    %v2379 = vunpack.c.l.b16 %v2246
    %v2380 = vunpack.c.l.b16 %v2247
    %v2381 = vunpack.c.l.b16 %v2248
    %v2382 = vunpack.c.l.b16 %v2249
    %v2383 = vunpack.c.l.b16 %v2250
    %v2384 = vunpack.c.l.b16 %v2251
    %v2385 = vunpack.c.l.b16 %v2252
    %v2386 = vunpack.c.l.b16 %v2253
    %v2387 = vunpack.c.l.b16 %v2254
    %v2388 = vunpack.c.l.b16 %v2255
    %v2389 = vunpack.c.l.b16 %v2256
    %v2390 = vunpack.c.l.b16 %v2257
    %v2391 = vunpack.c.l.b16 %v2258
    %v2392 = vunpack.c.l.b16 %v2259
    %v2393 = vunpack.c.l.b16 %v2260
    %v2394 = vunpack.c.l.b16 %v2261
    %v2395 = vunpack.c.l.b16 %v2262
    %v2396 = vunpack.c.l.b16 %v2263
    %v2397 = vunpack.c.l.b16 %v2264
    %v2398 = vunpack.c.l.b16 %v2265
    %v2399 = vunpack.c.l.b16 %v2266
    %v2400 = vunpack.c.l.b16 %v2267
    %v2401 = vunpack.c.l.b16 %v2268
    %v2402 = vunpack.c.l.b16 %v2269
    %v2403 = vunpack.c.l.b16 %v2270
    %v2404 = vunpack.c.l.b16 %v2271
    %v2405 = vunpack.c.l.b16 %v2272
    %v2406 = vunpack.c.l.b16 %v2273
    %v2407 = vunpack.c.l.b16 %v2274
    %v2408 = vunpack.c.l.b16 %v2275
    %v2409 = vunpack.c.l.b16 %v2276
    %v2410 = vunpack.c.l.b16 %v2277
    %v2411 = vunpack.c.l.b16 %v2278
    %v2412 = vunpack.c.l.b16 %v2279
    %v2413 = vunpack.c.l.b16 %v2280
    %v2414 = vunpack.c.l.b16 %v2281
    %v2415 = vunpack.c.l.b16 %v2282
    %v2416 = vunpack.c.l.b16 %v2283
    %v2417 = vunpack.c.l.b16 %v2284
    %v2418 = vunpack.c.l.b16 %v2285
    %v2419 = vunpack.c.l.b16 %v2286
    %v2420 = vunpack.c.l.b16 %v2287
    %v2421 = vunpack.c.l.b16 %v2288
    %v2422 = vunpack.c.l.b16 %v2289
    %v2423 = vunpack.c.l.b16 %v2290
    %v2424 = vunpack.c.l.b16 %v2291
    %v2425 = vunpack.c.l.b16 %v2292
    %v2426 = vunpack.c.l.b16 %v2293
    %v2427 = vpack.c.b16 %v2364, %v2363
    %v2428 = vpack.c.b16 %v2366, %v2365
    %v2429 = vpack.c.b16 %v2368, %v2367
    %v2430 = vpack.c.b16 %v2370, %v2369
    %v2431 = vpack.c.b16 %v2372, %v2371
    %v2432 = vpack.c.b16 %v2374, %v2373
    %v2433 = vpack.c.b16 %v2376, %v2375
    %v2434 = vpack.c.b16 %v2378, %v2377
    %v2435 = vpack.c.b16 %v2380, %v2379
    %v2436 = vpack.c.b16 %v2382, %v2381
    %v2437 = vpack.c.b16 %v2384, %v2383
    %v2438 = vpack.c.b16 %v2386, %v2385
    %v2439 = vpack.c.b16 %v2388, %v2387
    %v2440 = vpack.c.b16 %v2390, %v2389
    %v2441 = vpack.c.b16 %v2392, %v2391
    %v2442 = vpack.c.b16 %v2394, %v2393
    %v2443 = vpack.c.b16 %v2396, %v2395
    %v2444 = vpack.c.b16 %v2398, %v2397
    %v2445 = vpack.c.b16 %v2400, %v2399
    %v2446 = vpack.c.b16 %v2402, %v2401
    %v2447 = vpack.c.b16 %v2404, %v2403
    %v2448 = vpack.c.b16 %v2406, %v2405
    %v2449 = vpack.c.b16 %v2408, %v2407
    %v2450 = vpack.c.b16 %v2410, %v2409
    %v2451 = vpack.c.b16 %v2412, %v2411
    %v2452 = vpack.c.b16 %v2414, %v2413
    %v2453 = vpack.c.b16 %v2416, %v2415
    %v2454 = vpack.c.b16 %v2418, %v2417
    %v2455 = vpack.c.b16 %v2420, %v2419
    %v2456 = vpack.c.b16 %v2422, %v2421
    %v2457 = vpack.c.b16 %v2424, %v2423
    %v2458 = vpack.c.b16 %v2426, %v2425
    %2491 = vmatprep.subr.bf16.mxu0 0
    %2492 = vmatpush1.bf16.msra.mxu0 %v2427
    %2493 = vmatprep.subr.bf16.mxu0 0
    %2494 = vmatpush1.bf16.msra.mxu0 %v2428
    %2495 = vmatprep.subr.bf16.mxu0 0
    %2496 = vmatpush1.bf16.msra.mxu0 %v2429
    %2497 = vmatprep.subr.bf16.mxu0 0
    %2498 = vmatpush1.bf16.msra.mxu0 %v2430
    %2499 = vmatprep.subr.bf16.mxu0 0
    %2500 = vmatpush1.bf16.msra.mxu0 %v2431
    %2501 = vmatprep.subr.bf16.mxu0 0
    %2502 = vmatpush1.bf16.msra.mxu0 %v2432
    %2503 = vmatprep.subr.bf16.mxu0 0
    %2504 = vmatpush1.bf16.msra.mxu0 %v2433
    %2505 = vmatprep.subr.bf16.mxu0 0
    %2506 = vmatpush1.bf16.msra.mxu0 %v2434
    %2507 = vmatprep.subr.bf16.mxu0 0
    %2508 = vmatpush1.bf16.msra.mxu0 %v2435
    %2509 = vmatprep.subr.bf16.mxu0 0
    %2510 = vmatpush1.bf16.msra.mxu0 %v2436
    %2511 = vmatprep.subr.bf16.mxu0 0
    %2512 = vmatpush1.bf16.msra.mxu0 %v2437
    %2513 = vmatprep.subr.bf16.mxu0 0
    %2514 = vmatpush1.bf16.msra.mxu0 %v2438
    %2515 = vmatprep.subr.bf16.mxu0 0
    %2516 = vmatpush1.bf16.msra.mxu0 %v2439
    %2517 = vmatprep.subr.bf16.mxu0 0
    %2518 = vmatpush1.bf16.msra.mxu0 %v2440
    %2519 = vmatprep.subr.bf16.mxu0 0
    %2520 = vmatpush1.bf16.msra.mxu0 %v2441
    %2521 = vmatprep.subr.bf16.mxu0 0
    %2522 = vmatpush1.bf16.msra.mxu0 %v2442
    %2523 = vmatprep.mubr.bf16.mxu0 %v2227
    %2524 = vmatmul.mubr.bf16.gmra.mrb[0].mxu0 %v2226
    %v2525 = vpop.f32.mrb[0].mxu0
    %v2526 = vadd.f32 %v2298, %v2525
    %v2527 = vpop.f32.mrb[0].mxu0
    %v2528 = vpop.f32.mrb[0].mxu0
    %v2529 = vpop.f32.mrb[0].mxu0
    %2530 = vdwg.mxu0
    %2531 = vmatprep.subr.bf16.mxu0 0
    %2532 = vmatpush1.bf16.msra.mxu0 %v2443
    %2533 = vmatprep.subr.bf16.mxu0 0
    %2534 = vmatpush1.bf16.msra.mxu0 %v2444
    %2535 = vmatprep.subr.bf16.mxu0 0
    %2536 = vmatpush1.bf16.msra.mxu0 %v2445
    %2537 = vmatprep.subr.bf16.mxu0 0
    %2538 = vmatpush1.bf16.msra.mxu0 %v2446
    %2539 = vmatprep.subr.bf16.mxu0 0
    %2540 = vmatpush1.bf16.msra.mxu0 %v2447
    %2541 = vmatprep.subr.bf16.mxu0 0
    %2542 = vmatpush1.bf16.msra.mxu0 %v2448
    %2543 = vmatprep.subr.bf16.mxu0 0
    %2544 = vmatpush1.bf16.msra.mxu0 %v2449
    %2545 = vmatprep.subr.bf16.mxu0 0
    %2546 = vmatpush1.bf16.msra.mxu0 %v2450
    %2547 = vmatprep.subr.bf16.mxu0 0
    %2548 = vmatpush1.bf16.msra.mxu0 %v2451
    %2549 = vmatprep.subr.bf16.mxu0 0
    %2550 = vmatpush1.bf16.msra.mxu0 %v2452
    %2551 = vmatprep.subr.bf16.mxu0 0
    %2552 = vmatpush1.bf16.msra.mxu0 %v2453
    %2553 = vmatprep.subr.bf16.mxu0 0
    %2554 = vmatpush1.bf16.msra.mxu0 %v2454
    %2555 = vmatprep.subr.bf16.mxu0 0
    %2556 = vmatpush1.bf16.msra.mxu0 %v2455
    %2557 = vmatprep.subr.bf16.mxu0 0
    %2558 = vmatpush1.bf16.msra.mxu0 %v2456
    %2559 = vmatprep.subr.bf16.mxu0 0
    %2560 = vmatpush1.bf16.msra.mxu0 %v2457
    %2561 = vmatprep.subr.bf16.mxu0 0
    %2562 = vmatpush1.bf16.msra.mxu0 %v2458
    %2563 = vmatprep.mubr.bf16.mxu0 %v2229
    %2564 = vmatmul.mubr.bf16.gmra.mrb[0].mxu0 %v2228
    %v2565 = vpop.f32.mrb[0].mxu0
    %v2566 = vadd.f32 %v2526, %v2565
    %v2567 = vpop.f32.mrb[0].mxu0
    %v2568 = vpop.f32.mrb[0].mxu0
    %v2569 = vpop.f32.mrb[0].mxu0
    %2570 = vdwg.mxu0
    %v2571 = vtanh.pop %v2566
    %v2572 = vpack.c.bf16 %v2571, %v2571
    %2573 = vst [vmem:[#allocation11] sm:$0xf] %v2572
    // Predicated region
    $region46: #{tpu_custom_call.1} parent=1 // pred_check
      _
    $region47: #{tpu_custom_call.1} parent=1 // pred_check_branch
      %2575 = sbr.rel (0) target = $region49
    $region48: #{tpu_custom_call.1} parent=1 // pred_region
      %s2577 = ssub.s32 64, 64
      %2578 = vsyncadd [#allocation4], %s2577
      %s2580 = sshll.u32 [#allocation11], 4
      %s2581 = int_to_ptr.vmem [resolvable:$true] %s2580
      %2583 = dma.vmem_to_hbm [thread:$0]  %s2581, 64, %s6, [#allocation4]
    $region49: #{tpu_custom_call.1} parent=1 // pred_fallthru
      _
    // Predicated region
    $region50: #{tpu_custom_call.1} parent=1 // pred_check
      _
    $region51: #{tpu_custom_call.1} parent=1 // pred_check_branch
      %2585 = sbr.rel (0) target = $region53
    $region52: #{tpu_custom_call.1} parent=1 // pred_region
      %2586 = dma.done [#allocation4], 64
    $region53: #{tpu_custom_call.1} parent=1 // pred_fallthru
      _
    %2587 = vsyncpa [#allocation3], 1
    %2588 = vsyncpa [#allocation6], 1
    %2589 = vsyncpa [#allocation9], 1
    %2590 = vsyncpa [#allocation4], 1

</llo_original>
